<compile_context>
chip_gen: v7x
topology: tpu7x:2x2x1
jax: 0.10.0
libtpu: 0.0.40
codegen_flags: <defaults>
</compile_context>

<pallas_src>
import functools

import jax
import jax.numpy as jnp
from jax import lax
from jax.experimental import pallas as pl
from jax.experimental.pallas import tpu as pltpu


MODEL_SIZE = 10          # model_size (kept small; the module default is 50)
NUM_CH = 8               # num_channels
KSIZE = 25               # every conv in the generator uses kernel_size 25
NUM_CLASSES = 71         # ConditionalBatchNorm1d(..., 71)
BN_EPS = 1e-5


# ---------------------------------------------------------------------------
# Kernel 1: Conv1d   out[co,t] = sum_{ci,j} W[co,ci,j] * xpad[ci, t*s + j] + b[co]
# ---------------------------------------------------------------------------
def _conv1d_kernel(x_ref, w_ref, b_ref, o_ref, *, stride):
    # x_ref: (stride*Ci, U)  phase-split, zero-padded input for one batch elem:
    #        x_ref[r*Ci + ci, u] = xpad[ci, u*stride + r]
    # w_ref: (K, Co, Ci)     b_ref: (Co, 1)     o_ref: (Co, T_out)
    k_taps, _, ci = w_ref.shape
    t_out = o_ref.shape[-1]
    acc = jnp.zeros(o_ref.shape, jnp.float32)
    for j in range(k_taps):                      # static unroll: K tap-matmuls on the MXU
        r, q = j % stride, j // stride
        xs = x_ref[r * ci:(r + 1) * ci, q:q + t_out]          # (Ci, T_out), unit stride
        acc = acc + jnp.dot(w_ref[j], xs, preferred_element_type=jnp.float32)
    o_ref[...] = (acc + b_ref[...]).astype(o_ref.dtype)


def conv1d_pallas(x, w, b, *, stride, pad):
    """x: (B, Ci, L), w: (Co, Ci, K), b: (Co,) -> (B, Co, T_out)."""
    B, Ci, L = x.shape
    Co, _, K = w.shape
    Lp = L + 2 * pad
    t_out = (Lp - K) // stride + 1

    # Zero-pad, then phase-split along time so in-kernel tap loads are unit-stride.
    U = -(-Lp // stride)
    xp = jnp.pad(x, ((0, 0), (0, 0), (pad, pad + stride * U - Lp)))
    xph = xp.reshape(B, Ci, U, stride).transpose(0, 3, 1, 2).reshape(B, stride * Ci, U)

    w_k = jnp.transpose(w, (2, 0, 1))            # (K, Co, Ci)
    b2 = b.reshape(Co, 1).astype(jnp.float32)

    return pl.pallas_call(
        functools.partial(_conv1d_kernel, stride=stride),
        out_shape=jax.ShapeDtypeStruct((B, Co, t_out), x.dtype),
        grid_spec=pltpu.PrefetchScalarGridSpec(
            num_scalar_prefetch=0,
            grid=(B,),
            in_specs=[
                pl.BlockSpec((None, stride * Ci, U), lambda i: (i, 0, 0)),
                pl.BlockSpec((K, Co, Ci), lambda i: (0, 0, 0)),
                pl.BlockSpec((Co, 1), lambda i: (0, 0)),
            ],
            out_specs=pl.BlockSpec((None, Co, t_out), lambda i: (i, 0, 0)),
        ),
        compiler_params=pltpu.CompilerParams(dimension_semantics=("parallel",)),
    )(xph, w_k, b2)


# ---------------------------------------------------------------------------
# Kernel 2: fused conditional-BN affine + activation (per-(batch,channel) FMA)
# ---------------------------------------------------------------------------
def _affine_act_kernel(x_ref, s_ref, b_ref, o_ref, *, act):
    z = x_ref[...] * s_ref[...] + b_ref[...]
    if act == "leaky_relu":
        z = jnp.where(z >= 0, z, 0.01 * z)
    elif act == "relu":
        z = jnp.maximum(z, 0.0)
    elif act == "tanh":
        z = jnp.tanh(z)
    o_ref[...] = z.astype(o_ref.dtype)


def affine_act_pallas(x, scale, bias, act):
    B, C, T = x.shape
    return pl.pallas_call(
        functools.partial(_affine_act_kernel, act=act),
        out_shape=jax.ShapeDtypeStruct((B, C, T), x.dtype),
        grid_spec=pltpu.PrefetchScalarGridSpec(
            num_scalar_prefetch=0,
            grid=(B,),
            in_specs=[
                pl.BlockSpec((None, C, T), lambda i: (i, 0, 0)),
                pl.BlockSpec((None, C, 1), lambda i: (i, 0, 0)),
                pl.BlockSpec((None, C, 1), lambda i: (i, 0, 0)),
            ],
            out_specs=pl.BlockSpec((None, C, T), lambda i: (i, 0, 0)),
        ),
        compiler_params=pltpu.CompilerParams(dimension_semantics=("parallel",)),
    )(x, scale, bias)


# ---------------------------------------------------------------------------
# Layer wrappers (Pallas path + pure-XLA reference path)
# ---------------------------------------------------------------------------
def conv1d(x, w, b, *, stride, pad, use_pallas):
    if use_pallas:
        return conv1d_pallas(x, w, b, stride=stride, pad=pad)
    out = lax.conv_general_dilated(
        x, w, window_strides=(stride,), padding=[(pad, pad)],
        dimension_numbers=("NCH", "OIH", "NCH"),
        precision=lax.Precision.HIGHEST)
    return out + b[None, :, None]


def cbn_act(c, y, emb, act, *, use_pallas):
    """ConditionalBatchNorm1d (train-mode batch stats + class embedding) + activation."""
    B, C, _ = c.shape
    mean = jnp.mean(c, axis=(0, 2))                       # (C,)
    var = jnp.var(c, axis=(0, 2))                         # (C,), biased (BN forward)
    gb = jnp.take(emb, y, axis=0)                         # (B, 2C)
    gamma, beta = gb[:, :C], gb[:, C:]
    inv = lax.rsqrt(var + BN_EPS)                         # (C,)
    scale = gamma * inv[None, :]                          # (B, C)
    bias = beta - mean[None, :] * scale                   # (B, C)
    scale, bias = scale[:, :, None], bias[:, :, None]
    if use_pallas:
        return affine_act_pallas(c, scale, bias, act)
    z = c * scale + bias
    if act == "leaky_relu":
        return jnp.where(z >= 0, z, 0.01 * z)
    if act == "relu":
        return jnp.maximum(z, 0.0)
    return jnp.tanh(z)


# ---------------------------------------------------------------------------
# CondP2PGenerator
# ---------------------------------------------------------------------------
_CONV_CFG = [
    ("conv_1", NUM_CH, MODEL_SIZE // 5, 2),
    ("conv_2", MODEL_SIZE // 5, MODEL_SIZE // 2, 5),
    ("conv_3", MODEL_SIZE // 2, MODEL_SIZE, 2),
    ("conv_4", MODEL_SIZE, 3 * MODEL_SIZE, 5),
    ("conv_5", 3 * MODEL_SIZE, 5 * MODEL_SIZE, 5),
]
_DECONV_CFG = [
    ("deconv_2", 5 * MODEL_SIZE * 2, 3 * MODEL_SIZE, 5),
    ("deconv_3", 3 * MODEL_SIZE * 2, MODEL_SIZE, 5),
    ("deconv_5", MODEL_SIZE * 2, MODEL_SIZE // 2, 2),
    ("deconv_6", (MODEL_SIZE // 2) * 2, MODEL_SIZE // 5, 5),
    ("deconv_7", MODEL_SIZE // 5, NUM_CH, 2),
]


def build_params(key):
    params = {}
    cfgs = _CONV_CFG + _DECONV_CFG
    keys = jax.random.split(key, len(cfgs))
    for k, (name, ci, co, _) in zip(keys, cfgs):
        kw, kb, kg, kbt = jax.random.split(k, 4)
        params[name] = {
            "w": jax.random.normal(kw, (co, ci, KSIZE), jnp.float32)
                 * (2.0 / (ci * KSIZE)) ** 0.5,
            "b": 0.01 * jax.random.normal(kb, (co,), jnp.float32),
            # ConditionalBatchNorm1d embedding table: [gamma | beta] per class.
            "emb": jnp.concatenate(
                [1.0 + 0.1 * jax.random.normal(kg, (NUM_CLASSES, co), jnp.float32),
                 0.1 * jax.random.normal(kbt, (NUM_CLASSES, co), jnp.float32)],
                axis=1),
        }
    return params


def generator_forward(params, x, y, *, use_pallas):
    def down(h, name, stride):
        p = params[name]
        h = conv1d(h, p["w"], p["b"], stride=stride, pad=KSIZE // 2,
                   use_pallas=use_pallas)
        return cbn_act(h, y, p["emb"], "leaky_relu", use_pallas=use_pallas)

    def up(h, skip, name, factor, act):
        p = params[name]
        if skip is not None:
            h = jnp.concatenate([h, skip], axis=1)        # multi-input concat
        h = jnp.repeat(h, factor, axis=-1)                # nearest Upsample
        h = conv1d(h, p["w"], p["b"], stride=1, pad=KSIZE // 2,
                   use_pallas=use_pallas)
        return cbn_act(h, y, p["emb"], act, use_pallas=use_pallas)

    c1 = down(x, "conv_1", 2)
    c2 = down(c1, "conv_2", 5)
    c3 = down(c2, "conv_3", 2)
    c4 = down(c3, "conv_4", 5)
    c5 = down(c4, "conv_5", 5)

    h = up(c5, c5, "deconv_2", 5, "relu")   # x = conv_5_out.clone(); cat w/ conv_5_out
    h = up(h, c4, "deconv_3", 5, "relu")
    h = up(h, c3, "deconv_5", 2, "relu")
    h = up(h, c2, "deconv_6", 5, "relu")
    return up(h, None, "deconv_7", 2, "tanh")


if __name__ == "__main__":
    root = jax.random.PRNGKey(0)
    k_par, k_x, k_y, k_t1, k_t2 = jax.random.split(root, 5)

    params = build_params(k_par)
    B, L = 2, 2000   # L chosen so all skip-connection lengths line up (500x down/up)
    x = jax.random.normal(k_x, (B, NUM_CH, L), jnp.float32)
    y = jax.random.randint(k_y, (B,), 0, NUM_CLASSES)

    # --- unit check: Pallas conv kernel vs XLA conv (strided case) ---
    xt = jax.random.normal(k_t1, (2, 8, 250), jnp.float32)
    wt = 0.1 * jax.random.normal(k_t2, (16, 8, KSIZE), jnp.float32)
    bt = jnp.linspace(-0.1, 0.1, 16, dtype=jnp.float32)
    got = conv1d(xt, wt, bt, stride=5, pad=KSIZE // 2, use_pallas=True)
    want = conv1d(xt, wt, bt, stride=5, pad=KSIZE // 2, use_pallas=False)
    assert got.shape == want.shape
    assert jnp.allclose(got, want, atol=3e-2, rtol=3e-2), \
        float(jnp.max(jnp.abs(got - want)))

    # --- full CondP2PGenerator forward, Pallas path ---
    fwd = jax.jit(functools.partial(generator_forward, use_pallas=True))
    out = jax.block_until_ready(fwd(params, x, y))
    assert out.shape == (B, NUM_CH, L), out.shape
    assert bool(jnp.all(jnp.isfinite(out)))

    # --- end-to-end sanity check vs a pure-XLA reference forward ---
    ref = generator_forward(params, x, y, use_pallas=False)
    max_diff = float(jnp.max(jnp.abs(out - ref)))
    # Loose tolerance: in-kernel f32 MXU matmuls may use reduced-precision
    # passes vs the Precision.HIGHEST XLA reference, compounded over 10 layers.
    assert max_diff < 0.2, max_diff

    print("KERNEL_OK")
</pallas_src>

<mosaic_0001>
module attributes {stable_mosaic.version = 11 : i64} {
  func.func @_conv1d_kernel(%arg0: i32, %arg1: memref<1x40x55xf32, #tpu.memory_space<vmem>>, %arg2: memref<25x16x8xf32, #tpu.memory_space<vmem>>, %arg3: memref<16x1xf32, #tpu.memory_space<vmem>>, %arg4: memref<1x16x50xf32, #tpu.memory_space<vmem>>) attributes {dimension_semantics = [#tpu.dimension_semantics<parallel>], iteration_bounds = array<i64: 2>, scalar_prefetch = 0 : i64, scratch_operands = 0 : i64, tpu.core_type = #tpu.core_type<tc>, window_params = [{transform_indices = @transform_0, window_bounds = array<i64: 1, 40, 55>}, {pipeline_mode = #tpu.pipeline_mode<synchronous>, transform_indices = @transform_1, window_bounds = array<i64: 25, 16, 8>}, {pipeline_mode = #tpu.pipeline_mode<synchronous>, transform_indices = @transform_2, window_bounds = array<i64: 16, 1>}, {transform_indices = @transform_3, window_bounds = array<i64: 1, 16, 50>}]} {
    %cst = arith.constant 0.000000e+00 : f32
    %0 = vector.broadcast %cst : f32 to vector<16x50xf32>
    %c0 = arith.constant 0 : index
    %c0_0 = arith.constant 0 : index
    %c0_1 = arith.constant 0 : index
    %1 = vector.load %arg1[%c0, %c0_0, %c0_1] : memref<1x40x55xf32, #tpu.memory_space<vmem>>, vector<1x8x50xf32>
    %2 = vector.shape_cast %1 : vector<1x8x50xf32> to vector<8x50xf32>
    %c0_2 = arith.constant 0 : index
    %c0_3 = arith.constant 0 : index
    %c0_4 = arith.constant 0 : index
    %3 = vector.load %arg2[%c0_2, %c0_3, %c0_4] : memref<25x16x8xf32, #tpu.memory_space<vmem>>, vector<1x16x8xf32>
    %4 = vector.shape_cast %3 : vector<1x16x8xf32> to vector<16x8xf32>
    %cst_5 = arith.constant dense<0.000000e+00> : vector<16x50xf32>
    %5 = tpu.matmul %4, %2, %cst_5 {dimension_numbers = #tpu.dot_dimension_numbers<[1], [0], [0], [1], [0, 0, 1, 1], [], []>} : vector<16x8xf32>, vector<8x50xf32>, vector<16x50xf32> -> vector<16x50xf32>
    %6 = arith.addf %0, %5 : vector<16x50xf32>
    %c0_6 = arith.constant 0 : index
    %c8 = arith.constant 8 : index
    %c0_7 = arith.constant 0 : index
    %7 = vector.load %arg1[%c0_6, %c8, %c0_7] : memref<1x40x55xf32, #tpu.memory_space<vmem>>, vector<1x8x50xf32>
    %8 = vector.shape_cast %7 : vector<1x8x50xf32> to vector<8x50xf32>
    %c1 = arith.constant 1 : index
    %c0_8 = arith.constant 0 : index
    %c0_9 = arith.constant 0 : index
    %9 = vector.load %arg2[%c1, %c0_8, %c0_9] : memref<25x16x8xf32, #tpu.memory_space<vmem>>, vector<1x16x8xf32>
    %10 = vector.shape_cast %9 : vector<1x16x8xf32> to vector<16x8xf32>
    %cst_10 = arith.constant dense<0.000000e+00> : vector<16x50xf32>
    %11 = tpu.matmul %10, %8, %cst_10 {dimension_numbers = #tpu.dot_dimension_numbers<[1], [0], [0], [1], [0, 0, 1, 1], [], []>} : vector<16x8xf32>, vector<8x50xf32>, vector<16x50xf32> -> vector<16x50xf32>
    %12 = arith.addf %6, %11 : vector<16x50xf32>
    %c0_11 = arith.constant 0 : index
    %c16 = arith.constant 16 : index
    %c0_12 = arith.constant 0 : index
    %13 = vector.load %arg1[%c0_11, %c16, %c0_12] : memref<1x40x55xf32, #tpu.memory_space<vmem>>, vector<1x8x50xf32>
    %14 = vector.shape_cast %13 : vector<1x8x50xf32> to vector<8x50xf32>
    %c2 = arith.constant 2 : index
    %c0_13 = arith.constant 0 : index
    %c0_14 = arith.constant 0 : index
    %15 = vector.load %arg2[%c2, %c0_13, %c0_14] : memref<25x16x8xf32, #tpu.memory_space<vmem>>, vector<1x16x8xf32>
    %16 = vector.shape_cast %15 : vector<1x16x8xf32> to vector<16x8xf32>
    %cst_15 = arith.constant dense<0.000000e+00> : vector<16x50xf32>
    %17 = tpu.matmul %16, %14, %cst_15 {dimension_numbers = #tpu.dot_dimension_numbers<[1], [0], [0], [1], [0, 0, 1, 1], [], []>} : vector<16x8xf32>, vector<8x50xf32>, vector<16x50xf32> -> vector<16x50xf32>
    %18 = arith.addf %12, %17 : vector<16x50xf32>
    %c0_16 = arith.constant 0 : index
    %c24 = arith.constant 24 : index
    %c0_17 = arith.constant 0 : index
    %19 = vector.load %arg1[%c0_16, %c24, %c0_17] : memref<1x40x55xf32, #tpu.memory_space<vmem>>, vector<1x8x50xf32>
    %20 = vector.shape_cast %19 : vector<1x8x50xf32> to vector<8x50xf32>
    %c3 = arith.constant 3 : index
    %c0_18 = arith.constant 0 : index
    %c0_19 = arith.constant 0 : index
    %21 = vector.load %arg2[%c3, %c0_18, %c0_19] : memref<25x16x8xf32, #tpu.memory_space<vmem>>, vector<1x16x8xf32>
    %22 = vector.shape_cast %21 : vector<1x16x8xf32> to vector<16x8xf32>
    %cst_20 = arith.constant dense<0.000000e+00> : vector<16x50xf32>
    %23 = tpu.matmul %22, %20, %cst_20 {dimension_numbers = #tpu.dot_dimension_numbers<[1], [0], [0], [1], [0, 0, 1, 1], [], []>} : vector<16x8xf32>, vector<8x50xf32>, vector<16x50xf32> -> vector<16x50xf32>
    %24 = arith.addf %18, %23 : vector<16x50xf32>
    %c0_21 = arith.constant 0 : index
    %c32 = arith.constant 32 : index
    %c0_22 = arith.constant 0 : index
    %25 = vector.load %arg1[%c0_21, %c32, %c0_22] : memref<1x40x55xf32, #tpu.memory_space<vmem>>, vector<1x8x50xf32>
    %26 = vector.shape_cast %25 : vector<1x8x50xf32> to vector<8x50xf32>
    %c4 = arith.constant 4 : index
    %c0_23 = arith.constant 0 : index
    %c0_24 = arith.constant 0 : index
    %27 = vector.load %arg2[%c4, %c0_23, %c0_24] : memref<25x16x8xf32, #tpu.memory_space<vmem>>, vector<1x16x8xf32>
    %28 = vector.shape_cast %27 : vector<1x16x8xf32> to vector<16x8xf32>
    %cst_25 = arith.constant dense<0.000000e+00> : vector<16x50xf32>
    %29 = tpu.matmul %28, %26, %cst_25 {dimension_numbers = #tpu.dot_dimension_numbers<[1], [0], [0], [1], [0, 0, 1, 1], [], []>} : vector<16x8xf32>, vector<8x50xf32>, vector<16x50xf32> -> vector<16x50xf32>
    %30 = arith.addf %24, %29 : vector<16x50xf32>
    %c0_26 = arith.constant 0 : index
    %c0_27 = arith.constant 0 : index
    %c1_28 = arith.constant 1 : index
    %31 = vector.load %arg1[%c0_26, %c0_27, %c1_28] : memref<1x40x55xf32, #tpu.memory_space<vmem>>, vector<1x8x50xf32>
    %32 = vector.shape_cast %31 : vector<1x8x50xf32> to vector<8x50xf32>
    %c5 = arith.constant 5 : index
    %c0_29 = arith.constant 0 : index
    %c0_30 = arith.constant 0 : index
    %33 = vector.load %arg2[%c5, %c0_29, %c0_30] : memref<25x16x8xf32, #tpu.memory_space<vmem>>, vector<1x16x8xf32>
    %34 = vector.shape_cast %33 : vector<1x16x8xf32> to vector<16x8xf32>
    %cst_31 = arith.constant dense<0.000000e+00> : vector<16x50xf32>
    %35 = tpu.matmul %34, %32, %cst_31 {dimension_numbers = #tpu.dot_dimension_numbers<[1], [0], [0], [1], [0, 0, 1, 1], [], []>} : vector<16x8xf32>, vector<8x50xf32>, vector<16x50xf32> -> vector<16x50xf32>
    %36 = arith.addf %30, %35 : vector<16x50xf32>
    %c0_32 = arith.constant 0 : index
    %c8_33 = arith.constant 8 : index
    %c1_34 = arith.constant 1 : index
    %37 = vector.load %arg1[%c0_32, %c8_33, %c1_34] : memref<1x40x55xf32, #tpu.memory_space<vmem>>, vector<1x8x50xf32>
    %38 = vector.shape_cast %37 : vector<1x8x50xf32> to vector<8x50xf32>
    %c6 = arith.constant 6 : index
    %c0_35 = arith.constant 0 : index
    %c0_36 = arith.constant 0 : index
    %39 = vector.load %arg2[%c6, %c0_35, %c0_36] : memref<25x16x8xf32, #tpu.memory_space<vmem>>, vector<1x16x8xf32>
    %40 = vector.shape_cast %39 : vector<1x16x8xf32> to vector<16x8xf32>
    %cst_37 = arith.constant dense<0.000000e+00> : vector<16x50xf32>
    %41 = tpu.matmul %40, %38, %cst_37 {dimension_numbers = #tpu.dot_dimension_numbers<[1], [0], [0], [1], [0, 0, 1, 1], [], []>} : vector<16x8xf32>, vector<8x50xf32>, vector<16x50xf32> -> vector<16x50xf32>
    %42 = arith.addf %36, %41 : vector<16x50xf32>
    %c0_38 = arith.constant 0 : index
    %c16_39 = arith.constant 16 : index
    %c1_40 = arith.constant 1 : index
    %43 = vector.load %arg1[%c0_38, %c16_39, %c1_40] : memref<1x40x55xf32, #tpu.memory_space<vmem>>, vector<1x8x50xf32>
    %44 = vector.shape_cast %43 : vector<1x8x50xf32> to vector<8x50xf32>
    %c7 = arith.constant 7 : index
    %c0_41 = arith.constant 0 : index
    %c0_42 = arith.constant 0 : index
    %45 = vector.load %arg2[%c7, %c0_41, %c0_42] : memref<25x16x8xf32, #tpu.memory_space<vmem>>, vector<1x16x8xf32>
    %46 = vector.shape_cast %45 : vector<1x16x8xf32> to vector<16x8xf32>
    %cst_43 = arith.constant dense<0.000000e+00> : vector<16x50xf32>
    %47 = tpu.matmul %46, %44, %cst_43 {dimension_numbers = #tpu.dot_dimension_numbers<[1], [0], [0], [1], [0, 0, 1, 1], [], []>} : vector<16x8xf32>, vector<8x50xf32>, vector<16x50xf32> -> vector<16x50xf32>
    %48 = arith.addf %42, %47 : vector<16x50xf32>
    %c0_44 = arith.constant 0 : index
    %c24_45 = arith.constant 24 : index
    %c1_46 = arith.constant 1 : index
    %49 = vector.load %arg1[%c0_44, %c24_45, %c1_46] : memref<1x40x55xf32, #tpu.memory_space<vmem>>, vector<1x8x50xf32>
    %50 = vector.shape_cast %49 : vector<1x8x50xf32> to vector<8x50xf32>
    %c8_47 = arith.constant 8 : index
    %c0_48 = arith.constant 0 : index
    %c0_49 = arith.constant 0 : index
    %51 = vector.load %arg2[%c8_47, %c0_48, %c0_49] : memref<25x16x8xf32, #tpu.memory_space<vmem>>, vector<1x16x8xf32>
    %52 = vector.shape_cast %51 : vector<1x16x8xf32> to vector<16x8xf32>
    %cst_50 = arith.constant dense<0.000000e+00> : vector<16x50xf32>
    %53 = tpu.matmul %52, %50, %cst_50 {dimension_numbers = #tpu.dot_dimension_numbers<[1], [0], [0], [1], [0, 0, 1, 1], [], []>} : vector<16x8xf32>, vector<8x50xf32>, vector<16x50xf32> -> vector<16x50xf32>
    %54 = arith.addf %48, %53 : vector<16x50xf32>
    %c0_51 = arith.constant 0 : index
    %c32_52 = arith.constant 32 : index
    %c1_53 = arith.constant 1 : index
    %55 = vector.load %arg1[%c0_51, %c32_52, %c1_53] : memref<1x40x55xf32, #tpu.memory_space<vmem>>, vector<1x8x50xf32>
    %56 = vector.shape_cast %55 : vector<1x8x50xf32> to vector<8x50xf32>
    %c9 = arith.constant 9 : index
    %c0_54 = arith.constant 0 : index
    %c0_55 = arith.constant 0 : index
    %57 = vector.load %arg2[%c9, %c0_54, %c0_55] : memref<25x16x8xf32, #tpu.memory_space<vmem>>, vector<1x16x8xf32>
    %58 = vector.shape_cast %57 : vector<1x16x8xf32> to vector<16x8xf32>
    %cst_56 = arith.constant dense<0.000000e+00> : vector<16x50xf32>
    %59 = tpu.matmul %58, %56, %cst_56 {dimension_numbers = #tpu.dot_dimension_numbers<[1], [0], [0], [1], [0, 0, 1, 1], [], []>} : vector<16x8xf32>, vector<8x50xf32>, vector<16x50xf32> -> vector<16x50xf32>
    %60 = arith.addf %54, %59 : vector<16x50xf32>
    %c0_57 = arith.constant 0 : index
    %c0_58 = arith.constant 0 : index
    %c2_59 = arith.constant 2 : index
    %61 = vector.load %arg1[%c0_57, %c0_58, %c2_59] : memref<1x40x55xf32, #tpu.memory_space<vmem>>, vector<1x8x50xf32>
    %62 = vector.shape_cast %61 : vector<1x8x50xf32> to vector<8x50xf32>
    %c10 = arith.constant 10 : index
    %c0_60 = arith.constant 0 : index
    %c0_61 = arith.constant 0 : index
    %63 = vector.load %arg2[%c10, %c0_60, %c0_61] : memref<25x16x8xf32, #tpu.memory_space<vmem>>, vector<1x16x8xf32>
    %64 = vector.shape_cast %63 : vector<1x16x8xf32> to vector<16x8xf32>
    %cst_62 = arith.constant dense<0.000000e+00> : vector<16x50xf32>
    %65 = tpu.matmul %64, %62, %cst_62 {dimension_numbers = #tpu.dot_dimension_numbers<[1], [0], [0], [1], [0, 0, 1, 1], [], []>} : vector<16x8xf32>, vector<8x50xf32>, vector<16x50xf32> -> vector<16x50xf32>
    %66 = arith.addf %60, %65 : vector<16x50xf32>
    %c0_63 = arith.constant 0 : index
    %c8_64 = arith.constant 8 : index
    %c2_65 = arith.constant 2 : index
    %67 = vector.load %arg1[%c0_63, %c8_64, %c2_65] : memref<1x40x55xf32, #tpu.memory_space<vmem>>, vector<1x8x50xf32>
    %68 = vector.shape_cast %67 : vector<1x8x50xf32> to vector<8x50xf32>
    %c11 = arith.constant 11 : index
    %c0_66 = arith.constant 0 : index
    %c0_67 = arith.constant 0 : index
    %69 = vector.load %arg2[%c11, %c0_66, %c0_67] : memref<25x16x8xf32, #tpu.memory_space<vmem>>, vector<1x16x8xf32>
    %70 = vector.shape_cast %69 : vector<1x16x8xf32> to vector<16x8xf32>
    %cst_68 = arith.constant dense<0.000000e+00> : vector<16x50xf32>
    %71 = tpu.matmul %70, %68, %cst_68 {dimension_numbers = #tpu.dot_dimension_numbers<[1], [0], [0], [1], [0, 0, 1, 1], [], []>} : vector<16x8xf32>, vector<8x50xf32>, vector<16x50xf32> -> vector<16x50xf32>
    %72 = arith.addf %66, %71 : vector<16x50xf32>
    %c0_69 = arith.constant 0 : index
    %c16_70 = arith.constant 16 : index
    %c2_71 = arith.constant 2 : index
    %73 = vector.load %arg1[%c0_69, %c16_70, %c2_71] : memref<1x40x55xf32, #tpu.memory_space<vmem>>, vector<1x8x50xf32>
    %74 = vector.shape_cast %73 : vector<1x8x50xf32> to vector<8x50xf32>
    %c12 = arith.constant 12 : index
    %c0_72 = arith.constant 0 : index
    %c0_73 = arith.constant 0 : index
    %75 = vector.load %arg2[%c12, %c0_72, %c0_73] : memref<25x16x8xf32, #tpu.memory_space<vmem>>, vector<1x16x8xf32>
    %76 = vector.shape_cast %75 : vector<1x16x8xf32> to vector<16x8xf32>
    %cst_74 = arith.constant dense<0.000000e+00> : vector<16x50xf32>
    %77 = tpu.matmul %76, %74, %cst_74 {dimension_numbers = #tpu.dot_dimension_numbers<[1], [0], [0], [1], [0, 0, 1, 1], [], []>} : vector<16x8xf32>, vector<8x50xf32>, vector<16x50xf32> -> vector<16x50xf32>
    %78 = arith.addf %72, %77 : vector<16x50xf32>
    %c0_75 = arith.constant 0 : index
    %c24_76 = arith.constant 24 : index
    %c2_77 = arith.constant 2 : index
    %79 = vector.load %arg1[%c0_75, %c24_76, %c2_77] : memref<1x40x55xf32, #tpu.memory_space<vmem>>, vector<1x8x50xf32>
    %80 = vector.shape_cast %79 : vector<1x8x50xf32> to vector<8x50xf32>
    %c13 = arith.constant 13 : index
    %c0_78 = arith.constant 0 : index
    %c0_79 = arith.constant 0 : index
    %81 = vector.load %arg2[%c13, %c0_78, %c0_79] : memref<25x16x8xf32, #tpu.memory_space<vmem>>, vector<1x16x8xf32>
    %82 = vector.shape_cast %81 : vector<1x16x8xf32> to vector<16x8xf32>
    %cst_80 = arith.constant dense<0.000000e+00> : vector<16x50xf32>
    %83 = tpu.matmul %82, %80, %cst_80 {dimension_numbers = #tpu.dot_dimension_numbers<[1], [0], [0], [1], [0, 0, 1, 1], [], []>} : vector<16x8xf32>, vector<8x50xf32>, vector<16x50xf32> -> vector<16x50xf32>
    %84 = arith.addf %78, %83 : vector<16x50xf32>
    %c0_81 = arith.constant 0 : index
    %c32_82 = arith.constant 32 : index
    %c2_83 = arith.constant 2 : index
    %85 = vector.load %arg1[%c0_81, %c32_82, %c2_83] : memref<1x40x55xf32, #tpu.memory_space<vmem>>, vector<1x8x50xf32>
    %86 = vector.shape_cast %85 : vector<1x8x50xf32> to vector<8x50xf32>
    %c14 = arith.constant 14 : index
    %c0_84 = arith.constant 0 : index
    %c0_85 = arith.constant 0 : index
    %87 = vector.load %arg2[%c14, %c0_84, %c0_85] : memref<25x16x8xf32, #tpu.memory_space<vmem>>, vector<1x16x8xf32>
    %88 = vector.shape_cast %87 : vector<1x16x8xf32> to vector<16x8xf32>
    %cst_86 = arith.constant dense<0.000000e+00> : vector<16x50xf32>
    %89 = tpu.matmul %88, %86, %cst_86 {dimension_numbers = #tpu.dot_dimension_numbers<[1], [0], [0], [1], [0, 0, 1, 1], [], []>} : vector<16x8xf32>, vector<8x50xf32>, vector<16x50xf32> -> vector<16x50xf32>
    %90 = arith.addf %84, %89 : vector<16x50xf32>
    %c0_87 = arith.constant 0 : index
    %c0_88 = arith.constant 0 : index
    %c3_89 = arith.constant 3 : index
    %91 = vector.load %arg1[%c0_87, %c0_88, %c3_89] : memref<1x40x55xf32, #tpu.memory_space<vmem>>, vector<1x8x50xf32>
    %92 = vector.shape_cast %91 : vector<1x8x50xf32> to vector<8x50xf32>
    %c15 = arith.constant 15 : index
    %c0_90 = arith.constant 0 : index
    %c0_91 = arith.constant 0 : index
    %93 = vector.load %arg2[%c15, %c0_90, %c0_91] : memref<25x16x8xf32, #tpu.memory_space<vmem>>, vector<1x16x8xf32>
    %94 = vector.shape_cast %93 : vector<1x16x8xf32> to vector<16x8xf32>
    %cst_92 = arith.constant dense<0.000000e+00> : vector<16x50xf32>
    %95 = tpu.matmul %94, %92, %cst_92 {dimension_numbers = #tpu.dot_dimension_numbers<[1], [0], [0], [1], [0, 0, 1, 1], [], []>} : vector<16x8xf32>, vector<8x50xf32>, vector<16x50xf32> -> vector<16x50xf32>
    %96 = arith.addf %90, %95 : vector<16x50xf32>
    %c0_93 = arith.constant 0 : index
    %c8_94 = arith.constant 8 : index
    %c3_95 = arith.constant 3 : index
    %97 = vector.load %arg1[%c0_93, %c8_94, %c3_95] : memref<1x40x55xf32, #tpu.memory_space<vmem>>, vector<1x8x50xf32>
    %98 = vector.shape_cast %97 : vector<1x8x50xf32> to vector<8x50xf32>
    %c16_96 = arith.constant 16 : index
    %c0_97 = arith.constant 0 : index
    %c0_98 = arith.constant 0 : index
    %99 = vector.load %arg2[%c16_96, %c0_97, %c0_98] : memref<25x16x8xf32, #tpu.memory_space<vmem>>, vector<1x16x8xf32>
    %100 = vector.shape_cast %99 : vector<1x16x8xf32> to vector<16x8xf32>
    %cst_99 = arith.constant dense<0.000000e+00> : vector<16x50xf32>
    %101 = tpu.matmul %100, %98, %cst_99 {dimension_numbers = #tpu.dot_dimension_numbers<[1], [0], [0], [1], [0, 0, 1, 1], [], []>} : vector<16x8xf32>, vector<8x50xf32>, vector<16x50xf32> -> vector<16x50xf32>
    %102 = arith.addf %96, %101 : vector<16x50xf32>
    %c0_100 = arith.constant 0 : index
    %c16_101 = arith.constant 16 : index
    %c3_102 = arith.constant 3 : index
    %103 = vector.load %arg1[%c0_100, %c16_101, %c3_102] : memref<1x40x55xf32, #tpu.memory_space<vmem>>, vector<1x8x50xf32>
    %104 = vector.shape_cast %103 : vector<1x8x50xf32> to vector<8x50xf32>
    %c17 = arith.constant 17 : index
    %c0_103 = arith.constant 0 : index
    %c0_104 = arith.constant 0 : index
    %105 = vector.load %arg2[%c17, %c0_103, %c0_104] : memref<25x16x8xf32, #tpu.memory_space<vmem>>, vector<1x16x8xf32>
    %106 = vector.shape_cast %105 : vector<1x16x8xf32> to vector<16x8xf32>
    %cst_105 = arith.constant dense<0.000000e+00> : vector<16x50xf32>
    %107 = tpu.matmul %106, %104, %cst_105 {dimension_numbers = #tpu.dot_dimension_numbers<[1], [0], [0], [1], [0, 0, 1, 1], [], []>} : vector<16x8xf32>, vector<8x50xf32>, vector<16x50xf32> -> vector<16x50xf32>
    %108 = arith.addf %102, %107 : vector<16x50xf32>
    %c0_106 = arith.constant 0 : index
    %c24_107 = arith.constant 24 : index
    %c3_108 = arith.constant 3 : index
    %109 = vector.load %arg1[%c0_106, %c24_107, %c3_108] : memref<1x40x55xf32, #tpu.memory_space<vmem>>, vector<1x8x50xf32>
    %110 = vector.shape_cast %109 : vector<1x8x50xf32> to vector<8x50xf32>
    %c18 = arith.constant 18 : index
    %c0_109 = arith.constant 0 : index
    %c0_110 = arith.constant 0 : index
    %111 = vector.load %arg2[%c18, %c0_109, %c0_110] : memref<25x16x8xf32, #tpu.memory_space<vmem>>, vector<1x16x8xf32>
    %112 = vector.shape_cast %111 : vector<1x16x8xf32> to vector<16x8xf32>
    %cst_111 = arith.constant dense<0.000000e+00> : vector<16x50xf32>
    %113 = tpu.matmul %112, %110, %cst_111 {dimension_numbers = #tpu.dot_dimension_numbers<[1], [0], [0], [1], [0, 0, 1, 1], [], []>} : vector<16x8xf32>, vector<8x50xf32>, vector<16x50xf32> -> vector<16x50xf32>
    %114 = arith.addf %108, %113 : vector<16x50xf32>
    %c0_112 = arith.constant 0 : index
    %c32_113 = arith.constant 32 : index
    %c3_114 = arith.constant 3 : index
    %115 = vector.load %arg1[%c0_112, %c32_113, %c3_114] : memref<1x40x55xf32, #tpu.memory_space<vmem>>, vector<1x8x50xf32>
    %116 = vector.shape_cast %115 : vector<1x8x50xf32> to vector<8x50xf32>
    %c19 = arith.constant 19 : index
    %c0_115 = arith.constant 0 : index
    %c0_116 = arith.constant 0 : index
    %117 = vector.load %arg2[%c19, %c0_115, %c0_116] : memref<25x16x8xf32, #tpu.memory_space<vmem>>, vector<1x16x8xf32>
    %118 = vector.shape_cast %117 : vector<1x16x8xf32> to vector<16x8xf32>
    %cst_117 = arith.constant dense<0.000000e+00> : vector<16x50xf32>
    %119 = tpu.matmul %118, %116, %cst_117 {dimension_numbers = #tpu.dot_dimension_numbers<[1], [0], [0], [1], [0, 0, 1, 1], [], []>} : vector<16x8xf32>, vector<8x50xf32>, vector<16x50xf32> -> vector<16x50xf32>
    %120 = arith.addf %114, %119 : vector<16x50xf32>
    %c0_118 = arith.constant 0 : index
    %c0_119 = arith.constant 0 : index
    %c4_120 = arith.constant 4 : index
    %121 = vector.load %arg1[%c0_118, %c0_119, %c4_120] : memref<1x40x55xf32, #tpu.memory_space<vmem>>, vector<1x8x50xf32>
    %122 = vector.shape_cast %121 : vector<1x8x50xf32> to vector<8x50xf32>
    %c20 = arith.constant 20 : index
    %c0_121 = arith.constant 0 : index
    %c0_122 = arith.constant 0 : index
    %123 = vector.load %arg2[%c20, %c0_121, %c0_122] : memref<25x16x8xf32, #tpu.memory_space<vmem>>, vector<1x16x8xf32>
    %124 = vector.shape_cast %123 : vector<1x16x8xf32> to vector<16x8xf32>
    %cst_123 = arith.constant dense<0.000000e+00> : vector<16x50xf32>
    %125 = tpu.matmul %124, %122, %cst_123 {dimension_numbers = #tpu.dot_dimension_numbers<[1], [0], [0], [1], [0, 0, 1, 1], [], []>} : vector<16x8xf32>, vector<8x50xf32>, vector<16x50xf32> -> vector<16x50xf32>
    %126 = arith.addf %120, %125 : vector<16x50xf32>
    %c0_124 = arith.constant 0 : index
    %c8_125 = arith.constant 8 : index
    %c4_126 = arith.constant 4 : index
    %127 = vector.load %arg1[%c0_124, %c8_125, %c4_126] : memref<1x40x55xf32, #tpu.memory_space<vmem>>, vector<1x8x50xf32>
    %128 = vector.shape_cast %127 : vector<1x8x50xf32> to vector<8x50xf32>
    %c21 = arith.constant 21 : index
    %c0_127 = arith.constant 0 : index
    %c0_128 = arith.constant 0 : index
    %129 = vector.load %arg2[%c21, %c0_127, %c0_128] : memref<25x16x8xf32, #tpu.memory_space<vmem>>, vector<1x16x8xf32>
    %130 = vector.shape_cast %129 : vector<1x16x8xf32> to vector<16x8xf32>
    %cst_129 = arith.constant dense<0.000000e+00> : vector<16x50xf32>
    %131 = tpu.matmul %130, %128, %cst_129 {dimension_numbers = #tpu.dot_dimension_numbers<[1], [0], [0], [1], [0, 0, 1, 1], [], []>} : vector<16x8xf32>, vector<8x50xf32>, vector<16x50xf32> -> vector<16x50xf32>
    %132 = arith.addf %126, %131 : vector<16x50xf32>
    %c0_130 = arith.constant 0 : index
    %c16_131 = arith.constant 16 : index
    %c4_132 = arith.constant 4 : index
    %133 = vector.load %arg1[%c0_130, %c16_131, %c4_132] : memref<1x40x55xf32, #tpu.memory_space<vmem>>, vector<1x8x50xf32>
    %134 = vector.shape_cast %133 : vector<1x8x50xf32> to vector<8x50xf32>
    %c22 = arith.constant 22 : index
    %c0_133 = arith.constant 0 : index
    %c0_134 = arith.constant 0 : index
    %135 = vector.load %arg2[%c22, %c0_133, %c0_134] : memref<25x16x8xf32, #tpu.memory_space<vmem>>, vector<1x16x8xf32>
    %136 = vector.shape_cast %135 : vector<1x16x8xf32> to vector<16x8xf32>
    %cst_135 = arith.constant dense<0.000000e+00> : vector<16x50xf32>
    %137 = tpu.matmul %136, %134, %cst_135 {dimension_numbers = #tpu.dot_dimension_numbers<[1], [0], [0], [1], [0, 0, 1, 1], [], []>} : vector<16x8xf32>, vector<8x50xf32>, vector<16x50xf32> -> vector<16x50xf32>
    %138 = arith.addf %132, %137 : vector<16x50xf32>
    %c0_136 = arith.constant 0 : index
    %c24_137 = arith.constant 24 : index
    %c4_138 = arith.constant 4 : index
    %139 = vector.load %arg1[%c0_136, %c24_137, %c4_138] : memref<1x40x55xf32, #tpu.memory_space<vmem>>, vector<1x8x50xf32>
    %140 = vector.shape_cast %139 : vector<1x8x50xf32> to vector<8x50xf32>
    %c23 = arith.constant 23 : index
    %c0_139 = arith.constant 0 : index
    %c0_140 = arith.constant 0 : index
    %141 = vector.load %arg2[%c23, %c0_139, %c0_140] : memref<25x16x8xf32, #tpu.memory_space<vmem>>, vector<1x16x8xf32>
    %142 = vector.shape_cast %141 : vector<1x16x8xf32> to vector<16x8xf32>
    %cst_141 = arith.constant dense<0.000000e+00> : vector<16x50xf32>
    %143 = tpu.matmul %142, %140, %cst_141 {dimension_numbers = #tpu.dot_dimension_numbers<[1], [0], [0], [1], [0, 0, 1, 1], [], []>} : vector<16x8xf32>, vector<8x50xf32>, vector<16x50xf32> -> vector<16x50xf32>
    %144 = arith.addf %138, %143 : vector<16x50xf32>
    %c0_142 = arith.constant 0 : index
    %c32_143 = arith.constant 32 : index
    %c4_144 = arith.constant 4 : index
    %145 = vector.load %arg1[%c0_142, %c32_143, %c4_144] : memref<1x40x55xf32, #tpu.memory_space<vmem>>, vector<1x8x50xf32>
    %146 = vector.shape_cast %145 : vector<1x8x50xf32> to vector<8x50xf32>
    %c24_145 = arith.constant 24 : index
    %c0_146 = arith.constant 0 : index
    %c0_147 = arith.constant 0 : index
    %147 = vector.load %arg2[%c24_145, %c0_146, %c0_147] : memref<25x16x8xf32, #tpu.memory_space<vmem>>, vector<1x16x8xf32>
    %148 = vector.shape_cast %147 : vector<1x16x8xf32> to vector<16x8xf32>
    %cst_148 = arith.constant dense<0.000000e+00> : vector<16x50xf32>
    %149 = tpu.matmul %148, %146, %cst_148 {dimension_numbers = #tpu.dot_dimension_numbers<[1], [0], [0], [1], [0, 0, 1, 1], [], []>} : vector<16x8xf32>, vector<8x50xf32>, vector<16x50xf32> -> vector<16x50xf32>
    %150 = arith.addf %144, %149 : vector<16x50xf32>
    %c0_149 = arith.constant 0 : index
    %c0_150 = arith.constant 0 : index
    %151 = vector.load %arg3[%c0_149, %c0_150] : memref<16x1xf32, #tpu.memory_space<vmem>>, vector<16x1xf32>
    %152 = vector.broadcast %151 : vector<16x1xf32> to vector<16x50xf32>
    %153 = arith.addf %150, %152 : vector<16x50xf32>
    %c0_151 = arith.constant 0 : index
    %c0_152 = arith.constant 0 : index
    %c0_153 = arith.constant 0 : index
    %154 = vector.load %arg4[%c0_151, %c0_152, %c0_153] : memref<1x16x50xf32, #tpu.memory_space<vmem>>, vector<1x16x50xf32>
    %155 = vector.shape_cast %154 : vector<1x16x50xf32> to vector<16x50xf32>
    %156 = vector.shape_cast %153 : vector<16x50xf32> to vector<1x16x50xf32>
    tpu.vector_store %arg4[%c0_151, %c0_152, %c0_153], %156 {strides = array<i32>} : memref<1x16x50xf32, #tpu.memory_space<vmem>>, vector<1x16x50xf32>,
    return
  }
  func.func @transform_0(%arg0: i32) -> (i32, i32, i32) {
    %c0_i32 = arith.constant 0 : i32
    %c0_i32_0 = arith.constant 0 : i32
    %c0_i32_1 = arith.constant 0 : i32
    return %arg0, %c0_i32, %c0_i32_0 : i32, i32, i32
  }
  func.func @transform_1(%arg0: i32) -> (i32, i32, i32) {
    %c0_i32 = arith.constant 0 : i32
    %c0_i32_0 = arith.constant 0 : i32
    %c0_i32_1 = arith.constant 0 : i32
    %c0_i32_2 = arith.constant 0 : i32
    return %c0_i32, %c0_i32_0, %c0_i32_1 : i32, i32, i32
  }
  func.func @transform_2(%arg0: i32) -> (i32, i32) {
    %c0_i32 = arith.constant 0 : i32
    %c0_i32_0 = arith.constant 0 : i32
    %c0_i32_1 = arith.constant 0 : i32
    return %c0_i32, %c0_i32_0 : i32, i32
  }
  func.func @transform_3(%arg0: i32) -> (i32, i32, i32) {
    %c0_i32 = arith.constant 0 : i32
    %c0_i32_0 = arith.constant 0 : i32
    %c0_i32_1 = arith.constant 0 : i32
    return %arg0, %c0_i32, %c0_i32_0 : i32, i32, i32
  }
}

</mosaic_0001>

<llo_original>
// kernel: tpu_custom_call.1
$region0: #{tpu_custom_call.1}
  #allocation0 [shape = 'u32[]', space=smem, size = 0x4, offset = 0x4, fixed_abs, tag = 'smem constant byte address 0x4 - core index']
  #allocation1 [shape = 'u32[144,128]{1,0:T(1,128)}', space=vmem, size = 0x12000, scoped, tag = 'internal scratch']
  %s0 = inlined_call_operand.vmem [shape: f32[2,40,55], index: 0, kind: input, shape index: {}]
  %s1 = inlined_call_operand.vmem [shape: f32[25,16,8], index: 1, kind: input, shape index: {}]
  %s2 = inlined_call_operand.vmem [shape: f32[16,1], index: 2, kind: input, shape index: {}]
  %s3 = inlined_call_operand.hbm [shape: f32[2,16,50], index: 3, kind: output, shape index: {}]
  %s4 = sld [smem:[#allocation0]]
  $region45: #{tpu_custom_call.1} parent=0
    _
  %s6 = ssub.s32 1, %s4
  %s7 = scalar_select 0, %s6, %s4
  $region1: #{tpu_custom_call.1} parent=0
    #allocation2 [shape = 'u8[16384]{0}', space=vmem, size = 0x4000, scoped, tag = 'output window, operand 0']
    #allocation3 [shape = 's32[2]{0}', space=sflag, size = 0x8, scoped, tag = 'scoped memory for tpu_custom_call.1']
    %8 = vsyncpa [#allocation3], 0
    %s9 = scalar_lea.sflag [#allocation3], 1
    %10 = vsyncpa %s9, 0
    loop: start=0, step=1, limit=4
    $region2: #{tpu_custom_call.1} parent=1 // loop_pre_header
      _
    $region3: #{tpu_custom_call.1} parent=1 // loop_header
      %s12 = sphi 0, %s16
      %p13 = scmp.ge.s32.totalorder %s12, 4
      %s22 = sphi 0, %s24
      %s25 = sphi 0, %s22
      %s26 = sphi 0, %s25
      %s42 = sphi 0, %s26
      %s46 = sphi 0, %s46
      %s48 = sphi 0, %s46
      %s49 = sphi 0, %s48
      %s63 = sphi 0, %s49
      %s67 = sphi 0, %s67
      %s69 = sphi 0, %s67
      %s70 = sphi 0, %s69
      %s84 = sphi 0, %s70
      %s90 = sphi 0, %s92
      %s93 = sphi 0, %s90
      %s94 = sphi 0, %s93
      %s110 = sphi 0, %s94
    $region4: #{tpu_custom_call.1} parent=1 // loop_header_branch
      %15 = sbr.rel (%p13) target = $region8
    $region5: #{tpu_custom_call.1} parent=1 // loop_body
      %s17 = ssub.s32 %s12, 1
      %s18 = ssub.s32 %s12, 2
      %s19 = sadd.s32 %s12, 1
      %s20 = ssub.s32 %s12, %s19
      %p21 = scmp.eq.s32.totalorder %s20, 0
      %s23 = sadd.s32 %s22, 1
      %s24 = scalar_select %p21, %s22, %s23
      %p27 = pneg %p21
      %p28 = scmp.eq.s32.totalorder %s12, 1
      %p29 = por %p27, %p28
      %p30 = scmp.ne.s32.totalorder %s22, %s25
      %p31 = scmp.eq.s32.totalorder %s12, 0
      %p32 = por %p30, %p31
      %p33 = scmp.ne.s32.totalorder %s22, %s25
      %p34 = scmp.eq.s32.totalorder %s17, 1
      %p35 = por %p33, %p34
      %p36 = scmp.ne.s32.totalorder %s25, %s26
      %p37 = scmp.eq.s32.totalorder %s17, 0
      %p38 = por %p36, %p37
      %p39 = scmp.ne.s32.totalorder %s25, %s26
      %p40 = scmp.eq.s32.totalorder %s18, 1
      %p41 = por %p39, %p40
      %p43 = scmp.ne.s32.totalorder %s26, %s42
      %p44 = scmp.eq.s32.totalorder %s18, 0
      %p45 = por %p43, %p44
      %s47 = sadd.s32 %s46, 1
      %p50 = scmp.eq.s32.totalorder %s12, 1
      %p51 = scmp.ne.s32.totalorder %s46, %s48
      %p52 = scmp.eq.s32.totalorder %s12, 0
      %p53 = por %p51, %p52
      %p54 = scmp.ne.s32.totalorder %s46, %s48
      %p55 = scmp.eq.s32.totalorder %s17, 1
      %p56 = por %p54, %p55
      %p57 = scmp.ne.s32.totalorder %s48, %s49
      %p58 = scmp.eq.s32.totalorder %s17, 0
      %p59 = por %p57, %p58
      %p60 = scmp.ne.s32.totalorder %s48, %s49
      %p61 = scmp.eq.s32.totalorder %s18, 1
      %p62 = por %p60, %p61
      %p64 = scmp.ne.s32.totalorder %s49, %s63
      %p65 = scmp.eq.s32.totalorder %s18, 0
      %p66 = por %p64, %p65
      %s68 = sadd.s32 %s67, 1
      %p71 = scmp.eq.s32.totalorder %s12, 1
      %p72 = scmp.ne.s32.totalorder %s67, %s69
      %p73 = scmp.eq.s32.totalorder %s12, 0
      %p74 = por %p72, %p73
      %p75 = scmp.ne.s32.totalorder %s67, %s69
      %p76 = scmp.eq.s32.totalorder %s17, 1
      %p77 = por %p75, %p76
      %p78 = scmp.ne.s32.totalorder %s69, %s70
      %p79 = scmp.eq.s32.totalorder %s17, 0
      %p80 = por %p78, %p79
      %p81 = scmp.ne.s32.totalorder %s69, %s70
      %p82 = scmp.eq.s32.totalorder %s18, 1
      %p83 = por %p81, %p82
      %p85 = scmp.ne.s32.totalorder %s70, %s84
      %p86 = scmp.eq.s32.totalorder %s18, 0
      %p87 = por %p85, %p86
      %s88 = ssub.s32 %s12, %s19
      %p89 = scmp.eq.s32.totalorder %s88, 0
      %s91 = sadd.s32 %s90, 1
      %s92 = scalar_select %p89, %s90, %s91
      %p95 = pneg %p89
      %p96 = scmp.eq.s32.totalorder %s12, 1
      %p97 = por %p95, %p96
      %p98 = scmp.ne.s32.totalorder %s90, %s93
      %p99 = scmp.eq.s32.totalorder %s12, 0
      %p100 = por %p98, %p99
      %p101 = scmp.ne.s32.totalorder %s90, %s93
      %p102 = scmp.eq.s32.totalorder %s17, 1
      %p103 = por %p101, %p102
      %p104 = scmp.ne.s32.totalorder %s93, %s94
      %p105 = scmp.eq.s32.totalorder %s17, 0
      %p106 = por %p104, %p105
      %p107 = scmp.ne.s32.totalorder %s93, %s94
      %p108 = scmp.eq.s32.totalorder %s18, 1
      %p109 = por %p107, %p108
      %p111 = scmp.ne.s32.totalorder %s94, %s110
      %p112 = scmp.eq.s32.totalorder %s18, 0
      %p113 = por %p111, %p112
      %p114 = scmp.le.s32.totalorder 1, %s12
      %p115 = scmp.lt.s32.totalorder %s12, 3
      %p116 = pnand %p114, %p115
      %p117 = pneg %p116
      // Predicated region
      $region9: #{tpu_custom_call.1} parent=5 // pred_check
        _
      $region10: #{tpu_custom_call.1} parent=5 // pred_check_branch
        %119 = sbr.rel (%p116) target = $region12
      $region11: #{tpu_custom_call.1} parent=5 // pred_region
        %s120 = ssub.s32 %s12, 1
        // Predicated region
        $region13: #{tpu_custom_call.1} parent=11 // pred_check
          %p121 = pneg %p59
        $region14: #{tpu_custom_call.1} parent=11 // pred_check_branch
          %123 = sbr.rel (%p121) target = $region16
        $region15: #{tpu_custom_call.1} parent=11 // pred_region
          _
        $region16: #{tpu_custom_call.1} parent=11 // pred_fallthru
          _
        // Predicated region
        $region17: #{tpu_custom_call.1} parent=11 // pred_check
          %p124 = pneg %p80
        $region18: #{tpu_custom_call.1} parent=11 // pred_check_branch
          %126 = sbr.rel (%p124) target = $region20
        $region19: #{tpu_custom_call.1} parent=11 // pred_region
          _
        $region20: #{tpu_custom_call.1} parent=11 // pred_fallthru
          _
      $region12: #{tpu_custom_call.1} parent=5 // pred_fallthru
        _
      %p127 = scmp.lt.s32.totalorder %s12, 2
      // Predicated region
      $region21: #{tpu_custom_call.1} parent=5 // pred_check
        %p128 = pneg %p127
      $region22: #{tpu_custom_call.1} parent=5 // pred_check_branch
        %130 = sbr.rel (%p128) target = $region24
      $region23: #{tpu_custom_call.1} parent=5 // pred_region
        // Predicated region
        $region25: #{tpu_custom_call.1} parent=23 // pred_check
          %p131 = pneg %p32
        $region26: #{tpu_custom_call.1} parent=23 // pred_check_branch
          %133 = sbr.rel (%p131) target = $region28
        $region27: #{tpu_custom_call.1} parent=23 // pred_region
          %p134 = scmp.lt.s32.totalorder %s12, 1
          %s135 = scalar_select %p134, %s12, 1
          %s136 = smul.addr %s135, 5
          %s137 = smul.addr %s136, 8
          %s138 = scalar_lea.vmem %s0, %s137
        $region28: #{tpu_custom_call.1} parent=23 // pred_fallthru
          _
      $region24: #{tpu_custom_call.1} parent=5 // pred_fallthru
        _
      %p139 = scmp.le.s32.totalorder 1, %s12
      %p140 = scmp.lt.s32.totalorder %s12, 3
      %p141 = pnand %p139, %p140
      %p142 = pneg %p141
      // Predicated region
      $region29: #{tpu_custom_call.1} parent=5 // pred_check
        _
      $region30: #{tpu_custom_call.1} parent=5 // pred_check_branch
        %144 = sbr.rel (%p141) target = $region32
      $region31: #{tpu_custom_call.1} parent=5 // pred_region
        %s145 = ssub.s32 %s12, 1
        %p146 = scmp.lt.s32.totalorder %s17, 1
        %s147 = scalar_select %p146, %s17, 1
        %s148 = smul.addr %s147, 5
        %s149 = smul.addr %s148, 8
        %s150 = scalar_lea.vmem %s0, %s149
        %p151 = pneg %p38
        %p152 = pneg %p35
        %p153 = pneg %p59
        %p154 = pneg %p56
        %p155 = pneg %p80
        %p156 = pneg %p77
        %p157 = pneg %p106
        %p158 = pneg %p103
        %s159 = sand.u32 %s93, 1
        %s160 = scalar_lea.sflag [#allocation3], %s159
        %s161 = sand.u32 %s93, 1
        %s162 = smul.addr %s161, 16
        %s163 = scalar_lea.vmem [#allocation2], %s162
        %p164 = scmp.lt.s32.totalorder %s17, 1
        %s165 = scalar_select %p164, %s17, 1
        %s166 = smul.addr %s165, 5
        %s167 = smul.addr %s166, 8
        %s168 = scalar_lea.vmem %s0, %s167
        %v169 = vld [vmem:[%s168] sm:$0xff]
        %v170 = vld [vmem:[%s1] sm:$0xff]
        %v171 = vld [vmem:[%s1 + $0x8] sm:$0xff]
        %v172 = vld [vmem:[%s168 + $0x8] sm:$0xff]
        %s173 = scalar_lea.vmem %s1, 16
        %v174 = vld [vmem:[%s173] sm:$0xff]
        %v175 = vld [vmem:[%s173 + $0x8] sm:$0xff]
        %vm176 = vcmask 64512
        %v178 = vsel %vm176, %v174, 0
        %v181 = vsel %vm176, %v175, 0
        %183 = vmatprep.subr.mxu0 0.0
        %184 = vmatpush1.msra.mxu0 %v172
        %185 = vmatprep.subr.mxu0 0.0
        %186 = vmatpush1.msra.mxu0 0.0
        %187 = vmatprep.subr.mxu0 0.0
        %188 = vmatpush1.msra.mxu0 0.0
        %189 = vmatprep.subr.mxu0 0.0
        %190 = vmatpush1.msra.mxu0 0.0
        %191 = vmatprep.subr.mxu0 0.0
        %192 = vmatpush1.msra.mxu0 0.0
        %193 = vmatprep.subr.mxu0 0.0
        %194 = vmatpush1.msra.mxu0 0.0
        %195 = vmatprep.subr.mxu0 0.0
        %196 = vmatpush1.msra.mxu0 0.0
        %197 = vmatprep.subr.mxu0 0.0
        %198 = vmatpush1.msra.mxu0 0.0
        %199 = vmatprep.subr.mxu0 0.0
        %200 = vmatpush1.msra.mxu0 0.0
        %201 = vmatprep.subr.mxu0 0.0
        %202 = vmatpush1.msra.mxu0 0.0
        %203 = vmatprep.subr.mxu0 0.0
        %204 = vmatpush1.msra.mxu0 0.0
        %205 = vmatprep.subr.mxu0 0.0
        %206 = vmatpush1.msra.mxu0 0.0
        %207 = vmatprep.subr.mxu0 0.0
        %208 = vmatpush1.msra.mxu0 0.0
        %209 = vmatprep.subr.mxu0 0.0
        %210 = vmatpush1.msra.mxu0 0.0
        %211 = vmatprep.subr.mxu0 0.0
        %212 = vmatpush1.msra.mxu0 0.0
        %213 = vmatprep.subr.mxu0 0.0
        %214 = vmatpush1.msra.mxu0 0.0
        %215 = vmatprep.subr.mxu0 0.0
        %216 = vmatpush1.msra.mxu0 0.0
        %217 = vmatprep.subr.mxu0 0.0
        %218 = vmatpush1.msra.mxu0 0.0
        %219 = vmatprep.subr.mxu0 0.0
        %220 = vmatpush1.msra.mxu0 0.0
        %221 = vmatprep.subr.mxu0 0.0
        %222 = vmatpush1.msra.mxu0 0.0
        %223 = vmatprep.subr.mxu0 0.0
        %224 = vmatpush1.msra.mxu0 0.0
        %225 = vmatprep.subr.mxu0 0.0
        %226 = vmatpush1.msra.mxu0 0.0
        %227 = vmatprep.subr.mxu0 0.0
        %228 = vmatpush1.msra.mxu0 0.0
        %229 = vmatprep.subr.mxu0 0.0
        %230 = vmatpush1.msra.mxu0 0.0
        %231 = vmatprep.subr.mxu0 0.0
        %232 = vmatpush1.msra.mxu0 0.0
        %233 = vmatprep.subr.mxu0 0.0
        %234 = vmatpush1.msra.mxu0 0.0
        %235 = vmatprep.subr.mxu0 0.0
        %236 = vmatpush1.msra.mxu0 0.0
        %237 = vmatprep.subr.mxu0 0.0
        %238 = vmatpush1.msra.mxu0 0.0
        %239 = vmatprep.subr.mxu0 0.0
        %240 = vmatpush1.msra.mxu0 0.0
        %241 = vmatprep.subr.mxu0 0.0
        %242 = vmatpush1.msra.mxu0 0.0
        %243 = vmatprep.subr.mxu0 0.0
        %244 = vmatpush1.msra.mxu0 0.0
        %245 = vmatprep.subr.mxu0 0.0
        %246 = vmatpush1.msra.mxu0 0.0
        %247 = vmatprep.mubr.f32.mxu0 0.0
        %248 = vmatmul.mubr.f32.gmra.mrb[0].mxu0 %v178
        %v249 = vpop.f32.mrb[0].mxu0
        %v250 = vadd.f32 0.0, %v249
        %v251 = vpop.f32.mrb[0].mxu0
        %252 = vmatprep.mubr.f32.mxu0 0.0
        %253 = vmatmul.mubr.f32.gmra.mrb[0].mxu0 %v181
        %v254 = vpop.f32.mrb[0].mxu0
        %v255 = vadd.f32 0.0, %v254
        %v256 = vpop.f32.mrb[0].mxu0
        %257 = vdwg.mxu0
        %v259 = vsel %vm176, %v170, 0
        %v262 = vsel %vm176, %v171, 0
        %264 = vmatprep.subr.mxu0 0.0
        %265 = vmatpush1.msra.mxu0 %v169
        %266 = vmatprep.subr.mxu0 0.0
        %267 = vmatpush1.msra.mxu0 0.0
        %268 = vmatprep.subr.mxu0 0.0
        %269 = vmatpush1.msra.mxu0 0.0
        %270 = vmatprep.subr.mxu0 0.0
        %271 = vmatpush1.msra.mxu0 0.0
        %272 = vmatprep.subr.mxu0 0.0
        %273 = vmatpush1.msra.mxu0 0.0
        %274 = vmatprep.subr.mxu0 0.0
        %275 = vmatpush1.msra.mxu0 0.0
        %276 = vmatprep.subr.mxu0 0.0
        %277 = vmatpush1.msra.mxu0 0.0
        %278 = vmatprep.subr.mxu0 0.0
        %279 = vmatpush1.msra.mxu0 0.0
        %280 = vmatprep.subr.mxu0 0.0
        %281 = vmatpush1.msra.mxu0 0.0
        %282 = vmatprep.subr.mxu0 0.0
        %283 = vmatpush1.msra.mxu0 0.0
        %284 = vmatprep.subr.mxu0 0.0
        %285 = vmatpush1.msra.mxu0 0.0
        %286 = vmatprep.subr.mxu0 0.0
        %287 = vmatpush1.msra.mxu0 0.0
        %288 = vmatprep.subr.mxu0 0.0
        %289 = vmatpush1.msra.mxu0 0.0
        %290 = vmatprep.subr.mxu0 0.0
        %291 = vmatpush1.msra.mxu0 0.0
        %292 = vmatprep.subr.mxu0 0.0
        %293 = vmatpush1.msra.mxu0 0.0
        %294 = vmatprep.subr.mxu0 0.0
        %295 = vmatpush1.msra.mxu0 0.0
        %296 = vmatprep.subr.mxu0 0.0
        %297 = vmatpush1.msra.mxu0 0.0
        %298 = vmatprep.subr.mxu0 0.0
        %299 = vmatpush1.msra.mxu0 0.0
        %300 = vmatprep.subr.mxu0 0.0
        %301 = vmatpush1.msra.mxu0 0.0
        %302 = vmatprep.subr.mxu0 0.0
        %303 = vmatpush1.msra.mxu0 0.0
        %304 = vmatprep.subr.mxu0 0.0
        %305 = vmatpush1.msra.mxu0 0.0
        %306 = vmatprep.subr.mxu0 0.0
        %307 = vmatpush1.msra.mxu0 0.0
        %308 = vmatprep.subr.mxu0 0.0
        %309 = vmatpush1.msra.mxu0 0.0
        %310 = vmatprep.subr.mxu0 0.0
        %311 = vmatpush1.msra.mxu0 0.0
        %312 = vmatprep.subr.mxu0 0.0
        %313 = vmatpush1.msra.mxu0 0.0
        %314 = vmatprep.subr.mxu0 0.0
        %315 = vmatpush1.msra.mxu0 0.0
        %316 = vmatprep.subr.mxu0 0.0
        %317 = vmatpush1.msra.mxu0 0.0
        %318 = vmatprep.subr.mxu0 0.0
        %319 = vmatpush1.msra.mxu0 0.0
        %320 = vmatprep.subr.mxu0 0.0
        %321 = vmatpush1.msra.mxu0 0.0
        %322 = vmatprep.subr.mxu0 0.0
        %323 = vmatpush1.msra.mxu0 0.0
        %324 = vmatprep.subr.mxu0 0.0
        %325 = vmatpush1.msra.mxu0 0.0
        %326 = vmatprep.subr.mxu0 0.0
        %327 = vmatpush1.msra.mxu0 0.0
        %328 = vmatprep.mubr.f32.mxu0 0.0
        %329 = vmatmul.mubr.f32.gmra.mrb[0].mxu0 %v259
        %v330 = vpop.f32.mrb[0].mxu0
        %v331 = vadd.f32 %v250, %v330
        %v332 = vpop.f32.mrb[0].mxu0
        %333 = vmatprep.mubr.f32.mxu0 0.0
        %334 = vmatmul.mubr.f32.gmra.mrb[0].mxu0 %v262
        %v335 = vpop.f32.mrb[0].mxu0
        %v336 = vadd.f32 %v255, %v335
        %v337 = vpop.f32.mrb[0].mxu0
        %338 = vdwg.mxu0
        %v339 = vld [vmem:[%s168 + $0x10] sm:$0xff]
        %s340 = scalar_lea.vmem %s1, 32
        %v341 = vld [vmem:[%s340] sm:$0xff]
        %v342 = vld [vmem:[%s340 + $0x8] sm:$0xff]
        %v344 = vsel %vm176, %v341, 0
        %v347 = vsel %vm176, %v342, 0
        %349 = vmatprep.subr.mxu0 0.0
        %350 = vmatpush1.msra.mxu0 %v339
        %351 = vmatprep.subr.mxu0 0.0
        %352 = vmatpush1.msra.mxu0 0.0
        %353 = vmatprep.subr.mxu0 0.0
        %354 = vmatpush1.msra.mxu0 0.0
        %355 = vmatprep.subr.mxu0 0.0
        %356 = vmatpush1.msra.mxu0 0.0
        %357 = vmatprep.subr.mxu0 0.0
        %358 = vmatpush1.msra.mxu0 0.0
        %359 = vmatprep.subr.mxu0 0.0
        %360 = vmatpush1.msra.mxu0 0.0
        %361 = vmatprep.subr.mxu0 0.0
        %362 = vmatpush1.msra.mxu0 0.0
        %363 = vmatprep.subr.mxu0 0.0
        %364 = vmatpush1.msra.mxu0 0.0
        %365 = vmatprep.subr.mxu0 0.0
        %366 = vmatpush1.msra.mxu0 0.0
        %367 = vmatprep.subr.mxu0 0.0
        %368 = vmatpush1.msra.mxu0 0.0
        %369 = vmatprep.subr.mxu0 0.0
        %370 = vmatpush1.msra.mxu0 0.0
        %371 = vmatprep.subr.mxu0 0.0
        %372 = vmatpush1.msra.mxu0 0.0
        %373 = vmatprep.subr.mxu0 0.0
        %374 = vmatpush1.msra.mxu0 0.0
        %375 = vmatprep.subr.mxu0 0.0
        %376 = vmatpush1.msra.mxu0 0.0
        %377 = vmatprep.subr.mxu0 0.0
        %378 = vmatpush1.msra.mxu0 0.0
        %379 = vmatprep.subr.mxu0 0.0
        %380 = vmatpush1.msra.mxu0 0.0
        %381 = vmatprep.subr.mxu0 0.0
        %382 = vmatpush1.msra.mxu0 0.0
        %383 = vmatprep.subr.mxu0 0.0
        %384 = vmatpush1.msra.mxu0 0.0
        %385 = vmatprep.subr.mxu0 0.0
        %386 = vmatpush1.msra.mxu0 0.0
        %387 = vmatprep.subr.mxu0 0.0
        %388 = vmatpush1.msra.mxu0 0.0
        %389 = vmatprep.subr.mxu0 0.0
        %390 = vmatpush1.msra.mxu0 0.0
        %391 = vmatprep.subr.mxu0 0.0
        %392 = vmatpush1.msra.mxu0 0.0
        %393 = vmatprep.subr.mxu0 0.0
        %394 = vmatpush1.msra.mxu0 0.0
        %395 = vmatprep.subr.mxu0 0.0
        %396 = vmatpush1.msra.mxu0 0.0
        %397 = vmatprep.subr.mxu0 0.0
        %398 = vmatpush1.msra.mxu0 0.0
        %399 = vmatprep.subr.mxu0 0.0
        %400 = vmatpush1.msra.mxu0 0.0
        %401 = vmatprep.subr.mxu0 0.0
        %402 = vmatpush1.msra.mxu0 0.0
        %403 = vmatprep.subr.mxu0 0.0
        %404 = vmatpush1.msra.mxu0 0.0
        %405 = vmatprep.subr.mxu0 0.0
        %406 = vmatpush1.msra.mxu0 0.0
        %407 = vmatprep.subr.mxu0 0.0
        %408 = vmatpush1.msra.mxu0 0.0
        %409 = vmatprep.subr.mxu0 0.0
        %410 = vmatpush1.msra.mxu0 0.0
        %411 = vmatprep.subr.mxu0 0.0
        %412 = vmatpush1.msra.mxu0 0.0
        %413 = vmatprep.mubr.f32.mxu0 0.0
        %414 = vmatmul.mubr.f32.gmra.mrb[0].mxu0 %v344
        %v415 = vpop.f32.mrb[0].mxu0
        %v416 = vadd.f32 0.0, %v415
        %v417 = vpop.f32.mrb[0].mxu0
        %418 = vmatprep.mubr.f32.mxu0 0.0
        %419 = vmatmul.mubr.f32.gmra.mrb[0].mxu0 %v347
        %v420 = vpop.f32.mrb[0].mxu0
        %v421 = vadd.f32 0.0, %v420
        %v422 = vpop.f32.mrb[0].mxu0
        %423 = vdwg.mxu0
        %v424 = vadd.f32 %v331, %v416
        %v425 = vadd.f32 %v336, %v421
        %v426 = vld [vmem:[%s168 + $0x18] sm:$0xff]
        %s427 = scalar_lea.vmem %s1, 48
        %v428 = vld [vmem:[%s427] sm:$0xff]
        %v429 = vld [vmem:[%s427 + $0x8] sm:$0xff]
        %v431 = vsel %vm176, %v428, 0
        %v434 = vsel %vm176, %v429, 0
        %436 = vmatprep.subr.mxu0 0.0
        %437 = vmatpush1.msra.mxu0 %v426
        %438 = vmatprep.subr.mxu0 0.0
        %439 = vmatpush1.msra.mxu0 0.0
        %440 = vmatprep.subr.mxu0 0.0
        %441 = vmatpush1.msra.mxu0 0.0
        %442 = vmatprep.subr.mxu0 0.0
        %443 = vmatpush1.msra.mxu0 0.0
        %444 = vmatprep.subr.mxu0 0.0
        %445 = vmatpush1.msra.mxu0 0.0
        %446 = vmatprep.subr.mxu0 0.0
        %447 = vmatpush1.msra.mxu0 0.0
        %448 = vmatprep.subr.mxu0 0.0
        %449 = vmatpush1.msra.mxu0 0.0
        %450 = vmatprep.subr.mxu0 0.0
        %451 = vmatpush1.msra.mxu0 0.0
        %452 = vmatprep.subr.mxu0 0.0
        %453 = vmatpush1.msra.mxu0 0.0
        %454 = vmatprep.subr.mxu0 0.0
        %455 = vmatpush1.msra.mxu0 0.0
        %456 = vmatprep.subr.mxu0 0.0
        %457 = vmatpush1.msra.mxu0 0.0
        %458 = vmatprep.subr.mxu0 0.0
        %459 = vmatpush1.msra.mxu0 0.0
        %460 = vmatprep.subr.mxu0 0.0
        %461 = vmatpush1.msra.mxu0 0.0
        %462 = vmatprep.subr.mxu0 0.0
        %463 = vmatpush1.msra.mxu0 0.0
        %464 = vmatprep.subr.mxu0 0.0
        %465 = vmatpush1.msra.mxu0 0.0
        %466 = vmatprep.subr.mxu0 0.0
        %467 = vmatpush1.msra.mxu0 0.0
        %468 = vmatprep.subr.mxu0 0.0
        %469 = vmatpush1.msra.mxu0 0.0
        %470 = vmatprep.subr.mxu0 0.0
        %471 = vmatpush1.msra.mxu0 0.0
        %472 = vmatprep.subr.mxu0 0.0
        %473 = vmatpush1.msra.mxu0 0.0
        %474 = vmatprep.subr.mxu0 0.0
        %475 = vmatpush1.msra.mxu0 0.0
        %476 = vmatprep.subr.mxu0 0.0
        %477 = vmatpush1.msra.mxu0 0.0
        %478 = vmatprep.subr.mxu0 0.0
        %479 = vmatpush1.msra.mxu0 0.0
        %480 = vmatprep.subr.mxu0 0.0
        %481 = vmatpush1.msra.mxu0 0.0
        %482 = vmatprep.subr.mxu0 0.0
        %483 = vmatpush1.msra.mxu0 0.0
        %484 = vmatprep.subr.mxu0 0.0
        %485 = vmatpush1.msra.mxu0 0.0
        %486 = vmatprep.subr.mxu0 0.0
        %487 = vmatpush1.msra.mxu0 0.0
        %488 = vmatprep.subr.mxu0 0.0
        %489 = vmatpush1.msra.mxu0 0.0
        %490 = vmatprep.subr.mxu0 0.0
        %491 = vmatpush1.msra.mxu0 0.0
        %492 = vmatprep.subr.mxu0 0.0
        %493 = vmatpush1.msra.mxu0 0.0
        %494 = vmatprep.subr.mxu0 0.0
        %495 = vmatpush1.msra.mxu0 0.0
        %496 = vmatprep.subr.mxu0 0.0
        %497 = vmatpush1.msra.mxu0 0.0
        %498 = vmatprep.subr.mxu0 0.0
        %499 = vmatpush1.msra.mxu0 0.0
        %500 = vmatprep.mubr.f32.mxu0 0.0
        %501 = vmatmul.mubr.f32.gmra.mrb[0].mxu0 %v431
        %v502 = vpop.f32.mrb[0].mxu0
        %v503 = vadd.f32 0.0, %v502
        %v504 = vpop.f32.mrb[0].mxu0
        %505 = vmatprep.mubr.f32.mxu0 0.0
        %506 = vmatmul.mubr.f32.gmra.mrb[0].mxu0 %v434
        %v507 = vpop.f32.mrb[0].mxu0
        %v508 = vadd.f32 0.0, %v507
        %v509 = vpop.f32.mrb[0].mxu0
        %510 = vdwg.mxu0
        %v511 = vadd.f32 %v424, %v503
        %v512 = vadd.f32 %v425, %v508
        %v513 = vld [vmem:[%s168 + $0x20] sm:$0xff]
        %s514 = scalar_lea.vmem %s1, 64
        %v515 = vld [vmem:[%s514] sm:$0xff]
        %v516 = vld [vmem:[%s514 + $0x8] sm:$0xff]
        %v518 = vsel %vm176, %v515, 0
        %v521 = vsel %vm176, %v516, 0
        %523 = vmatprep.subr.mxu0 0.0
        %524 = vmatpush1.msra.mxu0 %v513
        %525 = vmatprep.subr.mxu0 0.0
        %526 = vmatpush1.msra.mxu0 0.0
        %527 = vmatprep.subr.mxu0 0.0
        %528 = vmatpush1.msra.mxu0 0.0
        %529 = vmatprep.subr.mxu0 0.0
        %530 = vmatpush1.msra.mxu0 0.0
        %531 = vmatprep.subr.mxu0 0.0
        %532 = vmatpush1.msra.mxu0 0.0
        %533 = vmatprep.subr.mxu0 0.0
        %534 = vmatpush1.msra.mxu0 0.0
        %535 = vmatprep.subr.mxu0 0.0
        %536 = vmatpush1.msra.mxu0 0.0
        %537 = vmatprep.subr.mxu0 0.0
        %538 = vmatpush1.msra.mxu0 0.0
        %539 = vmatprep.subr.mxu0 0.0
        %540 = vmatpush1.msra.mxu0 0.0
        %541 = vmatprep.subr.mxu0 0.0
        %542 = vmatpush1.msra.mxu0 0.0
        %543 = vmatprep.subr.mxu0 0.0
        %544 = vmatpush1.msra.mxu0 0.0
        %545 = vmatprep.subr.mxu0 0.0
        %546 = vmatpush1.msra.mxu0 0.0
        %547 = vmatprep.subr.mxu0 0.0
        %548 = vmatpush1.msra.mxu0 0.0
        %549 = vmatprep.subr.mxu0 0.0
        %550 = vmatpush1.msra.mxu0 0.0
        %551 = vmatprep.subr.mxu0 0.0
        %552 = vmatpush1.msra.mxu0 0.0
        %553 = vmatprep.subr.mxu0 0.0
        %554 = vmatpush1.msra.mxu0 0.0
        %555 = vmatprep.subr.mxu0 0.0
        %556 = vmatpush1.msra.mxu0 0.0
        %557 = vmatprep.subr.mxu0 0.0
        %558 = vmatpush1.msra.mxu0 0.0
        %559 = vmatprep.subr.mxu0 0.0
        %560 = vmatpush1.msra.mxu0 0.0
        %561 = vmatprep.subr.mxu0 0.0
        %562 = vmatpush1.msra.mxu0 0.0
        %563 = vmatprep.subr.mxu0 0.0
        %564 = vmatpush1.msra.mxu0 0.0
        %565 = vmatprep.subr.mxu0 0.0
        %566 = vmatpush1.msra.mxu0 0.0
        %567 = vmatprep.subr.mxu0 0.0
        %568 = vmatpush1.msra.mxu0 0.0
        %569 = vmatprep.subr.mxu0 0.0
        %570 = vmatpush1.msra.mxu0 0.0
        %571 = vmatprep.subr.mxu0 0.0
        %572 = vmatpush1.msra.mxu0 0.0
        %573 = vmatprep.subr.mxu0 0.0
        %574 = vmatpush1.msra.mxu0 0.0
        %575 = vmatprep.subr.mxu0 0.0
        %576 = vmatpush1.msra.mxu0 0.0
        %577 = vmatprep.subr.mxu0 0.0
        %578 = vmatpush1.msra.mxu0 0.0
        %579 = vmatprep.subr.mxu0 0.0
        %580 = vmatpush1.msra.mxu0 0.0
        %581 = vmatprep.subr.mxu0 0.0
        %582 = vmatpush1.msra.mxu0 0.0
        %583 = vmatprep.subr.mxu0 0.0
        %584 = vmatpush1.msra.mxu0 0.0
        %585 = vmatprep.subr.mxu0 0.0
        %586 = vmatpush1.msra.mxu0 0.0
        %587 = vmatprep.mubr.f32.mxu0 0.0
        %588 = vmatmul.mubr.f32.gmra.mrb[0].mxu0 %v518
        %v589 = vpop.f32.mrb[0].mxu0
        %v590 = vadd.f32 0.0, %v589
        %v591 = vpop.f32.mrb[0].mxu0
        %592 = vmatprep.mubr.f32.mxu0 0.0
        %593 = vmatmul.mubr.f32.gmra.mrb[0].mxu0 %v521
        %v594 = vpop.f32.mrb[0].mxu0
        %v595 = vadd.f32 0.0, %v594
        %v596 = vpop.f32.mrb[0].mxu0
        %597 = vdwg.mxu0
        %v598 = vadd.f32 %v511, %v590
        %v599 = vadd.f32 %v512, %v595
        %s600 = scalar_lea.vmem %s1, 80
        %v601 = vld [vmem:[%s600] sm:$0xff]
        %v602 = vld [vmem:[%s600 + $0x8] sm:$0xff]
        %604 = vrot.lane.b32.xlu0 %v169, 127
        %v605 = vpop.permute.xlu0 %604
        %v608 = vsel %vm176, %v601, 0
        %v611 = vsel %vm176, %v602, 0
        %613 = vmatprep.subr.mxu0 0.0
        %614 = vmatpush1.msra.mxu0 %v605
        %615 = vmatprep.subr.mxu0 0.0
        %616 = vmatpush1.msra.mxu0 0.0
        %617 = vmatprep.subr.mxu0 0.0
        %618 = vmatpush1.msra.mxu0 0.0
        %619 = vmatprep.subr.mxu0 0.0
        %620 = vmatpush1.msra.mxu0 0.0
        %621 = vmatprep.subr.mxu0 0.0
        %622 = vmatpush1.msra.mxu0 0.0
        %623 = vmatprep.subr.mxu0 0.0
        %624 = vmatpush1.msra.mxu0 0.0
        %625 = vmatprep.subr.mxu0 0.0
        %626 = vmatpush1.msra.mxu0 0.0
        %627 = vmatprep.subr.mxu0 0.0
        %628 = vmatpush1.msra.mxu0 0.0
        %629 = vmatprep.subr.mxu0 0.0
        %630 = vmatpush1.msra.mxu0 0.0
        %631 = vmatprep.subr.mxu0 0.0
        %632 = vmatpush1.msra.mxu0 0.0
        %633 = vmatprep.subr.mxu0 0.0
        %634 = vmatpush1.msra.mxu0 0.0
        %635 = vmatprep.subr.mxu0 0.0
        %636 = vmatpush1.msra.mxu0 0.0
        %637 = vmatprep.subr.mxu0 0.0
        %638 = vmatpush1.msra.mxu0 0.0
        %639 = vmatprep.subr.mxu0 0.0
        %640 = vmatpush1.msra.mxu0 0.0
        %641 = vmatprep.subr.mxu0 0.0
        %642 = vmatpush1.msra.mxu0 0.0
        %643 = vmatprep.subr.mxu0 0.0
        %644 = vmatpush1.msra.mxu0 0.0
        %645 = vmatprep.subr.mxu0 0.0
        %646 = vmatpush1.msra.mxu0 0.0
        %647 = vmatprep.subr.mxu0 0.0
        %648 = vmatpush1.msra.mxu0 0.0
        %649 = vmatprep.subr.mxu0 0.0
        %650 = vmatpush1.msra.mxu0 0.0
        %651 = vmatprep.subr.mxu0 0.0
        %652 = vmatpush1.msra.mxu0 0.0
        %653 = vmatprep.subr.mxu0 0.0
        %654 = vmatpush1.msra.mxu0 0.0
        %655 = vmatprep.subr.mxu0 0.0
        %656 = vmatpush1.msra.mxu0 0.0
        %657 = vmatprep.subr.mxu0 0.0
        %658 = vmatpush1.msra.mxu0 0.0
        %659 = vmatprep.subr.mxu0 0.0
        %660 = vmatpush1.msra.mxu0 0.0
        %661 = vmatprep.subr.mxu0 0.0
        %662 = vmatpush1.msra.mxu0 0.0
        %663 = vmatprep.subr.mxu0 0.0
        %664 = vmatpush1.msra.mxu0 0.0
        %665 = vmatprep.subr.mxu0 0.0
        %666 = vmatpush1.msra.mxu0 0.0
        %667 = vmatprep.subr.mxu0 0.0
        %668 = vmatpush1.msra.mxu0 0.0
        %669 = vmatprep.subr.mxu0 0.0
        %670 = vmatpush1.msra.mxu0 0.0
        %671 = vmatprep.subr.mxu0 0.0
        %672 = vmatpush1.msra.mxu0 0.0
        %673 = vmatprep.subr.mxu0 0.0
        %674 = vmatpush1.msra.mxu0 0.0
        %675 = vmatprep.subr.mxu0 0.0
        %676 = vmatpush1.msra.mxu0 0.0
        %677 = vmatprep.mubr.f32.mxu0 0.0
        %678 = vmatmul.mubr.f32.gmra.mrb[0].mxu0 %v608
        %v679 = vpop.f32.mrb[0].mxu0
        %v680 = vadd.f32 0.0, %v679
        %v681 = vpop.f32.mrb[0].mxu0
        %682 = vmatprep.mubr.f32.mxu0 0.0
        %683 = vmatmul.mubr.f32.gmra.mrb[0].mxu0 %v611
        %v684 = vpop.f32.mrb[0].mxu0
        %v685 = vadd.f32 0.0, %v684
        %v686 = vpop.f32.mrb[0].mxu0
        %687 = vdwg.mxu0
        %v688 = vadd.f32 %v598, %v680
        %v689 = vadd.f32 %v599, %v685
        %s690 = scalar_lea.vmem %s1, 96
        %v691 = vld [vmem:[%s690] sm:$0xff]
        %v692 = vld [vmem:[%s690 + $0x8] sm:$0xff]
        %694 = vrot.lane.b32.xlu0 %v172, 127
        %v695 = vpop.permute.xlu0 %694
        %v698 = vsel %vm176, %v691, 0
        %v701 = vsel %vm176, %v692, 0
        %703 = vmatprep.subr.mxu0 0.0
        %704 = vmatpush1.msra.mxu0 %v695
        %705 = vmatprep.subr.mxu0 0.0
        %706 = vmatpush1.msra.mxu0 0.0
        %707 = vmatprep.subr.mxu0 0.0
        %708 = vmatpush1.msra.mxu0 0.0
        %709 = vmatprep.subr.mxu0 0.0
        %710 = vmatpush1.msra.mxu0 0.0
        %711 = vmatprep.subr.mxu0 0.0
        %712 = vmatpush1.msra.mxu0 0.0
        %713 = vmatprep.subr.mxu0 0.0
        %714 = vmatpush1.msra.mxu0 0.0
        %715 = vmatprep.subr.mxu0 0.0
        %716 = vmatpush1.msra.mxu0 0.0
        %717 = vmatprep.subr.mxu0 0.0
        %718 = vmatpush1.msra.mxu0 0.0
        %719 = vmatprep.subr.mxu0 0.0
        %720 = vmatpush1.msra.mxu0 0.0
        %721 = vmatprep.subr.mxu0 0.0
        %722 = vmatpush1.msra.mxu0 0.0
        %723 = vmatprep.subr.mxu0 0.0
        %724 = vmatpush1.msra.mxu0 0.0
        %725 = vmatprep.subr.mxu0 0.0
        %726 = vmatpush1.msra.mxu0 0.0
        %727 = vmatprep.subr.mxu0 0.0
        %728 = vmatpush1.msra.mxu0 0.0
        %729 = vmatprep.subr.mxu0 0.0
        %730 = vmatpush1.msra.mxu0 0.0
        %731 = vmatprep.subr.mxu0 0.0
        %732 = vmatpush1.msra.mxu0 0.0
        %733 = vmatprep.subr.mxu0 0.0
        %734 = vmatpush1.msra.mxu0 0.0
        %735 = vmatprep.subr.mxu0 0.0
        %736 = vmatpush1.msra.mxu0 0.0
        %737 = vmatprep.subr.mxu0 0.0
        %738 = vmatpush1.msra.mxu0 0.0
        %739 = vmatprep.subr.mxu0 0.0
        %740 = vmatpush1.msra.mxu0 0.0
        %741 = vmatprep.subr.mxu0 0.0
        %742 = vmatpush1.msra.mxu0 0.0
        %743 = vmatprep.subr.mxu0 0.0
        %744 = vmatpush1.msra.mxu0 0.0
        %745 = vmatprep.subr.mxu0 0.0
        %746 = vmatpush1.msra.mxu0 0.0
        %747 = vmatprep.subr.mxu0 0.0
        %748 = vmatpush1.msra.mxu0 0.0
        %749 = vmatprep.subr.mxu0 0.0
        %750 = vmatpush1.msra.mxu0 0.0
        %751 = vmatprep.subr.mxu0 0.0
        %752 = vmatpush1.msra.mxu0 0.0
        %753 = vmatprep.subr.mxu0 0.0
        %754 = vmatpush1.msra.mxu0 0.0
        %755 = vmatprep.subr.mxu0 0.0
        %756 = vmatpush1.msra.mxu0 0.0
        %757 = vmatprep.subr.mxu0 0.0
        %758 = vmatpush1.msra.mxu0 0.0
        %759 = vmatprep.subr.mxu0 0.0
        %760 = vmatpush1.msra.mxu0 0.0
        %761 = vmatprep.subr.mxu0 0.0
        %762 = vmatpush1.msra.mxu0 0.0
        %763 = vmatprep.subr.mxu0 0.0
        %764 = vmatpush1.msra.mxu0 0.0
        %765 = vmatprep.subr.mxu0 0.0
        %766 = vmatpush1.msra.mxu0 0.0
        %767 = vmatprep.mubr.f32.mxu0 0.0
        %768 = vmatmul.mubr.f32.gmra.mrb[0].mxu0 %v698
        %v769 = vpop.f32.mrb[0].mxu0
        %v770 = vadd.f32 0.0, %v769
        %v771 = vpop.f32.mrb[0].mxu0
        %772 = vmatprep.mubr.f32.mxu0 0.0
        %773 = vmatmul.mubr.f32.gmra.mrb[0].mxu0 %v701
        %v774 = vpop.f32.mrb[0].mxu0
        %v775 = vadd.f32 0.0, %v774
        %v776 = vpop.f32.mrb[0].mxu0
        %777 = vdwg.mxu0
        %v778 = vadd.f32 %v688, %v770
        %v779 = vadd.f32 %v689, %v775
        %s780 = scalar_lea.vmem %s1, 112
        %v781 = vld [vmem:[%s780] sm:$0xff]
        %v782 = vld [vmem:[%s780 + $0x8] sm:$0xff]
        %784 = vrot.lane.b32.xlu0 %v339, 127
        %v785 = vpop.permute.xlu0 %784
        %v788 = vsel %vm176, %v781, 0
        %v791 = vsel %vm176, %v782, 0
        %793 = vmatprep.subr.mxu0 0.0
        %794 = vmatpush1.msra.mxu0 %v785
        %795 = vmatprep.subr.mxu0 0.0
        %796 = vmatpush1.msra.mxu0 0.0
        %797 = vmatprep.subr.mxu0 0.0
        %798 = vmatpush1.msra.mxu0 0.0
        %799 = vmatprep.subr.mxu0 0.0
        %800 = vmatpush1.msra.mxu0 0.0
        %801 = vmatprep.subr.mxu0 0.0
        %802 = vmatpush1.msra.mxu0 0.0
        %803 = vmatprep.subr.mxu0 0.0
        %804 = vmatpush1.msra.mxu0 0.0
        %805 = vmatprep.subr.mxu0 0.0
        %806 = vmatpush1.msra.mxu0 0.0
        %807 = vmatprep.subr.mxu0 0.0
        %808 = vmatpush1.msra.mxu0 0.0
        %809 = vmatprep.subr.mxu0 0.0
        %810 = vmatpush1.msra.mxu0 0.0
        %811 = vmatprep.subr.mxu0 0.0
        %812 = vmatpush1.msra.mxu0 0.0
        %813 = vmatprep.subr.mxu0 0.0
        %814 = vmatpush1.msra.mxu0 0.0
        %815 = vmatprep.subr.mxu0 0.0
        %816 = vmatpush1.msra.mxu0 0.0
        %817 = vmatprep.subr.mxu0 0.0
        %818 = vmatpush1.msra.mxu0 0.0
        %819 = vmatprep.subr.mxu0 0.0
        %820 = vmatpush1.msra.mxu0 0.0
        %821 = vmatprep.subr.mxu0 0.0
        %822 = vmatpush1.msra.mxu0 0.0
        %823 = vmatprep.subr.mxu0 0.0
        %824 = vmatpush1.msra.mxu0 0.0
        %825 = vmatprep.subr.mxu0 0.0
        %826 = vmatpush1.msra.mxu0 0.0
        %827 = vmatprep.subr.mxu0 0.0
        %828 = vmatpush1.msra.mxu0 0.0
        %829 = vmatprep.subr.mxu0 0.0
        %830 = vmatpush1.msra.mxu0 0.0
        %831 = vmatprep.subr.mxu0 0.0
        %832 = vmatpush1.msra.mxu0 0.0
        %833 = vmatprep.subr.mxu0 0.0
        %834 = vmatpush1.msra.mxu0 0.0
        %835 = vmatprep.subr.mxu0 0.0
        %836 = vmatpush1.msra.mxu0 0.0
        %837 = vmatprep.subr.mxu0 0.0
        %838 = vmatpush1.msra.mxu0 0.0
        %839 = vmatprep.subr.mxu0 0.0
        %840 = vmatpush1.msra.mxu0 0.0
        %841 = vmatprep.subr.mxu0 0.0
        %842 = vmatpush1.msra.mxu0 0.0
        %843 = vmatprep.subr.mxu0 0.0
        %844 = vmatpush1.msra.mxu0 0.0
        %845 = vmatprep.subr.mxu0 0.0
        %846 = vmatpush1.msra.mxu0 0.0
        %847 = vmatprep.subr.mxu0 0.0
        %848 = vmatpush1.msra.mxu0 0.0
        %849 = vmatprep.subr.mxu0 0.0
        %850 = vmatpush1.msra.mxu0 0.0
        %851 = vmatprep.subr.mxu0 0.0
        %852 = vmatpush1.msra.mxu0 0.0
        %853 = vmatprep.subr.mxu0 0.0
        %854 = vmatpush1.msra.mxu0 0.0
        %855 = vmatprep.subr.mxu0 0.0
        %856 = vmatpush1.msra.mxu0 0.0
        %857 = vmatprep.mubr.f32.mxu0 0.0
        %858 = vmatmul.mubr.f32.gmra.mrb[0].mxu0 %v788
        %v859 = vpop.f32.mrb[0].mxu0
        %v860 = vadd.f32 0.0, %v859
        %v861 = vpop.f32.mrb[0].mxu0
        %862 = vmatprep.mubr.f32.mxu0 0.0
        %863 = vmatmul.mubr.f32.gmra.mrb[0].mxu0 %v791
        %v864 = vpop.f32.mrb[0].mxu0
        %v865 = vadd.f32 0.0, %v864
        %v866 = vpop.f32.mrb[0].mxu0
        %867 = vdwg.mxu0
        %v868 = vadd.f32 %v778, %v860
        %v869 = vadd.f32 %v779, %v865
        %s870 = scalar_lea.vmem %s1, 128
        %v871 = vld [vmem:[%s870] sm:$0xff]
        %v872 = vld [vmem:[%s870 + $0x8] sm:$0xff]
        %874 = vrot.lane.b32.xlu0 %v426, 127
        %v875 = vpop.permute.xlu0 %874
        %v878 = vsel %vm176, %v871, 0
        %v881 = vsel %vm176, %v872, 0
        %883 = vmatprep.subr.mxu0 0.0
        %884 = vmatpush1.msra.mxu0 %v875
        %885 = vmatprep.subr.mxu0 0.0
        %886 = vmatpush1.msra.mxu0 0.0
        %887 = vmatprep.subr.mxu0 0.0
        %888 = vmatpush1.msra.mxu0 0.0
        %889 = vmatprep.subr.mxu0 0.0
        %890 = vmatpush1.msra.mxu0 0.0
        %891 = vmatprep.subr.mxu0 0.0
        %892 = vmatpush1.msra.mxu0 0.0
        %893 = vmatprep.subr.mxu0 0.0
        %894 = vmatpush1.msra.mxu0 0.0
        %895 = vmatprep.subr.mxu0 0.0
        %896 = vmatpush1.msra.mxu0 0.0
        %897 = vmatprep.subr.mxu0 0.0
        %898 = vmatpush1.msra.mxu0 0.0
        %899 = vmatprep.subr.mxu0 0.0
        %900 = vmatpush1.msra.mxu0 0.0
        %901 = vmatprep.subr.mxu0 0.0
        %902 = vmatpush1.msra.mxu0 0.0
        %903 = vmatprep.subr.mxu0 0.0
        %904 = vmatpush1.msra.mxu0 0.0
        %905 = vmatprep.subr.mxu0 0.0
        %906 = vmatpush1.msra.mxu0 0.0
        %907 = vmatprep.subr.mxu0 0.0
        %908 = vmatpush1.msra.mxu0 0.0
        %909 = vmatprep.subr.mxu0 0.0
        %910 = vmatpush1.msra.mxu0 0.0
        %911 = vmatprep.subr.mxu0 0.0
        %912 = vmatpush1.msra.mxu0 0.0
        %913 = vmatprep.subr.mxu0 0.0
        %914 = vmatpush1.msra.mxu0 0.0
        %915 = vmatprep.subr.mxu0 0.0
        %916 = vmatpush1.msra.mxu0 0.0
        %917 = vmatprep.subr.mxu0 0.0
        %918 = vmatpush1.msra.mxu0 0.0
        %919 = vmatprep.subr.mxu0 0.0
        %920 = vmatpush1.msra.mxu0 0.0
        %921 = vmatprep.subr.mxu0 0.0
        %922 = vmatpush1.msra.mxu0 0.0
        %923 = vmatprep.subr.mxu0 0.0
        %924 = vmatpush1.msra.mxu0 0.0
        %925 = vmatprep.subr.mxu0 0.0
        %926 = vmatpush1.msra.mxu0 0.0
        %927 = vmatprep.subr.mxu0 0.0
        %928 = vmatpush1.msra.mxu0 0.0
        %929 = vmatprep.subr.mxu0 0.0
        %930 = vmatpush1.msra.mxu0 0.0
        %931 = vmatprep.subr.mxu0 0.0
        %932 = vmatpush1.msra.mxu0 0.0
        %933 = vmatprep.subr.mxu0 0.0
        %934 = vmatpush1.msra.mxu0 0.0
        %935 = vmatprep.subr.mxu0 0.0
        %936 = vmatpush1.msra.mxu0 0.0
        %937 = vmatprep.subr.mxu0 0.0
        %938 = vmatpush1.msra.mxu0 0.0
        %939 = vmatprep.subr.mxu0 0.0
        %940 = vmatpush1.msra.mxu0 0.0
        %941 = vmatprep.subr.mxu0 0.0
        %942 = vmatpush1.msra.mxu0 0.0
        %943 = vmatprep.subr.mxu0 0.0
        %944 = vmatpush1.msra.mxu0 0.0
        %945 = vmatprep.subr.mxu0 0.0
        %946 = vmatpush1.msra.mxu0 0.0
        %947 = vmatprep.mubr.f32.mxu0 0.0
        %948 = vmatmul.mubr.f32.gmra.mrb[0].mxu0 %v878
        %v949 = vpop.f32.mrb[0].mxu0
        %v950 = vadd.f32 0.0, %v949
        %v951 = vpop.f32.mrb[0].mxu0
        %952 = vmatprep.mubr.f32.mxu0 0.0
        %953 = vmatmul.mubr.f32.gmra.mrb[0].mxu0 %v881
        %v954 = vpop.f32.mrb[0].mxu0
        %v955 = vadd.f32 0.0, %v954
        %v956 = vpop.f32.mrb[0].mxu0
        %957 = vdwg.mxu0
        %v958 = vadd.f32 %v868, %v950
        %v959 = vadd.f32 %v869, %v955
        %s960 = scalar_lea.vmem %s1, 144
        %v961 = vld [vmem:[%s960] sm:$0xff]
        %v962 = vld [vmem:[%s960 + $0x8] sm:$0xff]
        %964 = vrot.lane.b32.xlu0 %v513, 127
        %v965 = vpop.permute.xlu0 %964
        %v968 = vsel %vm176, %v961, 0
        %v971 = vsel %vm176, %v962, 0
        %973 = vmatprep.subr.mxu0 0.0
        %974 = vmatpush1.msra.mxu0 %v965
        %975 = vmatprep.subr.mxu0 0.0
        %976 = vmatpush1.msra.mxu0 0.0
        %977 = vmatprep.subr.mxu0 0.0
        %978 = vmatpush1.msra.mxu0 0.0
        %979 = vmatprep.subr.mxu0 0.0
        %980 = vmatpush1.msra.mxu0 0.0
        %981 = vmatprep.subr.mxu0 0.0
        %982 = vmatpush1.msra.mxu0 0.0
        %983 = vmatprep.subr.mxu0 0.0
        %984 = vmatpush1.msra.mxu0 0.0
        %985 = vmatprep.subr.mxu0 0.0
        %986 = vmatpush1.msra.mxu0 0.0
        %987 = vmatprep.subr.mxu0 0.0
        %988 = vmatpush1.msra.mxu0 0.0
        %989 = vmatprep.subr.mxu0 0.0
        %990 = vmatpush1.msra.mxu0 0.0
        %991 = vmatprep.subr.mxu0 0.0
        %992 = vmatpush1.msra.mxu0 0.0
        %993 = vmatprep.subr.mxu0 0.0
        %994 = vmatpush1.msra.mxu0 0.0
        %995 = vmatprep.subr.mxu0 0.0
        %996 = vmatpush1.msra.mxu0 0.0
        %997 = vmatprep.subr.mxu0 0.0
        %998 = vmatpush1.msra.mxu0 0.0
        %999 = vmatprep.subr.mxu0 0.0
        %1000 = vmatpush1.msra.mxu0 0.0
        %1001 = vmatprep.subr.mxu0 0.0
        %1002 = vmatpush1.msra.mxu0 0.0
        %1003 = vmatprep.subr.mxu0 0.0
        %1004 = vmatpush1.msra.mxu0 0.0
        %1005 = vmatprep.subr.mxu0 0.0
        %1006 = vmatpush1.msra.mxu0 0.0
        %1007 = vmatprep.subr.mxu0 0.0
        %1008 = vmatpush1.msra.mxu0 0.0
        %1009 = vmatprep.subr.mxu0 0.0
        %1010 = vmatpush1.msra.mxu0 0.0
        %1011 = vmatprep.subr.mxu0 0.0
        %1012 = vmatpush1.msra.mxu0 0.0
        %1013 = vmatprep.subr.mxu0 0.0
        %1014 = vmatpush1.msra.mxu0 0.0
        %1015 = vmatprep.subr.mxu0 0.0
        %1016 = vmatpush1.msra.mxu0 0.0
        %1017 = vmatprep.subr.mxu0 0.0
        %1018 = vmatpush1.msra.mxu0 0.0
        %1019 = vmatprep.subr.mxu0 0.0
        %1020 = vmatpush1.msra.mxu0 0.0
        %1021 = vmatprep.subr.mxu0 0.0
        %1022 = vmatpush1.msra.mxu0 0.0
        %1023 = vmatprep.subr.mxu0 0.0
        %1024 = vmatpush1.msra.mxu0 0.0
        %1025 = vmatprep.subr.mxu0 0.0
        %1026 = vmatpush1.msra.mxu0 0.0
        %1027 = vmatprep.subr.mxu0 0.0
        %1028 = vmatpush1.msra.mxu0 0.0
        %1029 = vmatprep.subr.mxu0 0.0
        %1030 = vmatpush1.msra.mxu0 0.0
        %1031 = vmatprep.subr.mxu0 0.0
        %1032 = vmatpush1.msra.mxu0 0.0
        %1033 = vmatprep.subr.mxu0 0.0
        %1034 = vmatpush1.msra.mxu0 0.0
        %1035 = vmatprep.subr.mxu0 0.0
        %1036 = vmatpush1.msra.mxu0 0.0
        %1037 = vmatprep.mubr.f32.mxu0 0.0
        %1038 = vmatmul.mubr.f32.gmra.mrb[0].mxu0 %v968
        %v1039 = vpop.f32.mrb[0].mxu0
        %v1040 = vadd.f32 0.0, %v1039
        %v1041 = vpop.f32.mrb[0].mxu0
        %1042 = vmatprep.mubr.f32.mxu0 0.0
        %1043 = vmatmul.mubr.f32.gmra.mrb[0].mxu0 %v971
        %v1044 = vpop.f32.mrb[0].mxu0
        %v1045 = vadd.f32 0.0, %v1044
        %v1046 = vpop.f32.mrb[0].mxu0
        %1047 = vdwg.mxu0
        %v1048 = vadd.f32 %v958, %v1040
        %v1049 = vadd.f32 %v959, %v1045
        %s1050 = scalar_lea.vmem %s1, 160
        %v1051 = vld [vmem:[%s1050] sm:$0xff]
        %v1052 = vld [vmem:[%s1050 + $0x8] sm:$0xff]
        %1053 = vrot.lane.b32.xlu0 %v169, 126
        %v1054 = vpop.permute.xlu0 %1053
        %v1057 = vsel %vm176, %v1051, 0
        %v1060 = vsel %vm176, %v1052, 0
        %1062 = vmatprep.subr.mxu0 0.0
        %1063 = vmatpush1.msra.mxu0 %v1054
        %1064 = vmatprep.subr.mxu0 0.0
        %1065 = vmatpush1.msra.mxu0 0.0
        %1066 = vmatprep.subr.mxu0 0.0
        %1067 = vmatpush1.msra.mxu0 0.0
        %1068 = vmatprep.subr.mxu0 0.0
        %1069 = vmatpush1.msra.mxu0 0.0
        %1070 = vmatprep.subr.mxu0 0.0
        %1071 = vmatpush1.msra.mxu0 0.0
        %1072 = vmatprep.subr.mxu0 0.0
        %1073 = vmatpush1.msra.mxu0 0.0
        %1074 = vmatprep.subr.mxu0 0.0
        %1075 = vmatpush1.msra.mxu0 0.0
        %1076 = vmatprep.subr.mxu0 0.0
        %1077 = vmatpush1.msra.mxu0 0.0
        %1078 = vmatprep.subr.mxu0 0.0
        %1079 = vmatpush1.msra.mxu0 0.0
        %1080 = vmatprep.subr.mxu0 0.0
        %1081 = vmatpush1.msra.mxu0 0.0
        %1082 = vmatprep.subr.mxu0 0.0
        %1083 = vmatpush1.msra.mxu0 0.0
        %1084 = vmatprep.subr.mxu0 0.0
        %1085 = vmatpush1.msra.mxu0 0.0
        %1086 = vmatprep.subr.mxu0 0.0
        %1087 = vmatpush1.msra.mxu0 0.0
        %1088 = vmatprep.subr.mxu0 0.0
        %1089 = vmatpush1.msra.mxu0 0.0
        %1090 = vmatprep.subr.mxu0 0.0
        %1091 = vmatpush1.msra.mxu0 0.0
        %1092 = vmatprep.subr.mxu0 0.0
        %1093 = vmatpush1.msra.mxu0 0.0
        %1094 = vmatprep.subr.mxu0 0.0
        %1095 = vmatpush1.msra.mxu0 0.0
        %1096 = vmatprep.subr.mxu0 0.0
        %1097 = vmatpush1.msra.mxu0 0.0
        %1098 = vmatprep.subr.mxu0 0.0
        %1099 = vmatpush1.msra.mxu0 0.0
        %1100 = vmatprep.subr.mxu0 0.0
        %1101 = vmatpush1.msra.mxu0 0.0
        %1102 = vmatprep.subr.mxu0 0.0
        %1103 = vmatpush1.msra.mxu0 0.0
        %1104 = vmatprep.subr.mxu0 0.0
        %1105 = vmatpush1.msra.mxu0 0.0
        %1106 = vmatprep.subr.mxu0 0.0
        %1107 = vmatpush1.msra.mxu0 0.0
        %1108 = vmatprep.subr.mxu0 0.0
        %1109 = vmatpush1.msra.mxu0 0.0
        %1110 = vmatprep.subr.mxu0 0.0
        %1111 = vmatpush1.msra.mxu0 0.0
        %1112 = vmatprep.subr.mxu0 0.0
        %1113 = vmatpush1.msra.mxu0 0.0
        %1114 = vmatprep.subr.mxu0 0.0
        %1115 = vmatpush1.msra.mxu0 0.0
        %1116 = vmatprep.subr.mxu0 0.0
        %1117 = vmatpush1.msra.mxu0 0.0
        %1118 = vmatprep.subr.mxu0 0.0
        %1119 = vmatpush1.msra.mxu0 0.0
        %1120 = vmatprep.subr.mxu0 0.0
        %1121 = vmatpush1.msra.mxu0 0.0
        %1122 = vmatprep.subr.mxu0 0.0
        %1123 = vmatpush1.msra.mxu0 0.0
        %1124 = vmatprep.subr.mxu0 0.0
        %1125 = vmatpush1.msra.mxu0 0.0
        %1126 = vmatprep.mubr.f32.mxu0 0.0
        %1127 = vmatmul.mubr.f32.gmra.mrb[0].mxu0 %v1057
        %v1128 = vpop.f32.mrb[0].mxu0
        %v1129 = vadd.f32 0.0, %v1128
        %v1130 = vpop.f32.mrb[0].mxu0
        %1131 = vmatprep.mubr.f32.mxu0 0.0
        %1132 = vmatmul.mubr.f32.gmra.mrb[0].mxu0 %v1060
        %v1133 = vpop.f32.mrb[0].mxu0
        %v1134 = vadd.f32 0.0, %v1133
        %v1135 = vpop.f32.mrb[0].mxu0
        %1136 = vdwg.mxu0
        %v1137 = vadd.f32 %v1048, %v1129
        %v1138 = vadd.f32 %v1049, %v1134
        %s1139 = scalar_lea.vmem %s1, 176
        %v1140 = vld [vmem:[%s1139] sm:$0xff]
        %v1141 = vld [vmem:[%s1139 + $0x8] sm:$0xff]
        %1142 = vrot.lane.b32.xlu0 %v172, 126
        %v1143 = vpop.permute.xlu0 %1142
        %v1146 = vsel %vm176, %v1140, 0
        %v1149 = vsel %vm176, %v1141, 0
        %1151 = vmatprep.subr.mxu0 0.0
        %1152 = vmatpush1.msra.mxu0 %v1143
        %1153 = vmatprep.subr.mxu0 0.0
        %1154 = vmatpush1.msra.mxu0 0.0
        %1155 = vmatprep.subr.mxu0 0.0
        %1156 = vmatpush1.msra.mxu0 0.0
        %1157 = vmatprep.subr.mxu0 0.0
        %1158 = vmatpush1.msra.mxu0 0.0
        %1159 = vmatprep.subr.mxu0 0.0
        %1160 = vmatpush1.msra.mxu0 0.0
        %1161 = vmatprep.subr.mxu0 0.0
        %1162 = vmatpush1.msra.mxu0 0.0
        %1163 = vmatprep.subr.mxu0 0.0
        %1164 = vmatpush1.msra.mxu0 0.0
        %1165 = vmatprep.subr.mxu0 0.0
        %1166 = vmatpush1.msra.mxu0 0.0
        %1167 = vmatprep.subr.mxu0 0.0
        %1168 = vmatpush1.msra.mxu0 0.0
        %1169 = vmatprep.subr.mxu0 0.0
        %1170 = vmatpush1.msra.mxu0 0.0
        %1171 = vmatprep.subr.mxu0 0.0
        %1172 = vmatpush1.msra.mxu0 0.0
        %1173 = vmatprep.subr.mxu0 0.0
        %1174 = vmatpush1.msra.mxu0 0.0
        %1175 = vmatprep.subr.mxu0 0.0
        %1176 = vmatpush1.msra.mxu0 0.0
        %1177 = vmatprep.subr.mxu0 0.0
        %1178 = vmatpush1.msra.mxu0 0.0
        %1179 = vmatprep.subr.mxu0 0.0
        %1180 = vmatpush1.msra.mxu0 0.0
        %1181 = vmatprep.subr.mxu0 0.0
        %1182 = vmatpush1.msra.mxu0 0.0
        %1183 = vmatprep.subr.mxu0 0.0
        %1184 = vmatpush1.msra.mxu0 0.0
        %1185 = vmatprep.subr.mxu0 0.0
        %1186 = vmatpush1.msra.mxu0 0.0
        %1187 = vmatprep.subr.mxu0 0.0
        %1188 = vmatpush1.msra.mxu0 0.0
        %1189 = vmatprep.subr.mxu0 0.0
        %1190 = vmatpush1.msra.mxu0 0.0
        %1191 = vmatprep.subr.mxu0 0.0
        %1192 = vmatpush1.msra.mxu0 0.0
        %1193 = vmatprep.subr.mxu0 0.0
        %1194 = vmatpush1.msra.mxu0 0.0
        %1195 = vmatprep.subr.mxu0 0.0
        %1196 = vmatpush1.msra.mxu0 0.0
        %1197 = vmatprep.subr.mxu0 0.0
        %1198 = vmatpush1.msra.mxu0 0.0
        %1199 = vmatprep.subr.mxu0 0.0
        %1200 = vmatpush1.msra.mxu0 0.0
        %1201 = vmatprep.subr.mxu0 0.0
        %1202 = vmatpush1.msra.mxu0 0.0
        %1203 = vmatprep.subr.mxu0 0.0
        %1204 = vmatpush1.msra.mxu0 0.0
        %1205 = vmatprep.subr.mxu0 0.0
        %1206 = vmatpush1.msra.mxu0 0.0
        %1207 = vmatprep.subr.mxu0 0.0
        %1208 = vmatpush1.msra.mxu0 0.0
        %1209 = vmatprep.subr.mxu0 0.0
        %1210 = vmatpush1.msra.mxu0 0.0
        %1211 = vmatprep.subr.mxu0 0.0
        %1212 = vmatpush1.msra.mxu0 0.0
        %1213 = vmatprep.subr.mxu0 0.0
        %1214 = vmatpush1.msra.mxu0 0.0
        %1215 = vmatprep.mubr.f32.mxu0 0.0
        %1216 = vmatmul.mubr.f32.gmra.mrb[0].mxu0 %v1146
        %v1217 = vpop.f32.mrb[0].mxu0
        %v1218 = vadd.f32 0.0, %v1217
        %v1219 = vpop.f32.mrb[0].mxu0
        %1220 = vmatprep.mubr.f32.mxu0 0.0
        %1221 = vmatmul.mubr.f32.gmra.mrb[0].mxu0 %v1149
        %v1222 = vpop.f32.mrb[0].mxu0
        %v1223 = vadd.f32 0.0, %v1222
        %v1224 = vpop.f32.mrb[0].mxu0
        %1225 = vdwg.mxu0
        %v1226 = vadd.f32 %v1137, %v1218
        %v1227 = vadd.f32 %v1138, %v1223
        %s1228 = scalar_lea.vmem %s1, 192
        %v1229 = vld [vmem:[%s1228] sm:$0xff]
        %v1230 = vld [vmem:[%s1228 + $0x8] sm:$0xff]
        %1231 = vrot.lane.b32.xlu0 %v339, 126
        %v1232 = vpop.permute.xlu0 %1231
        %v1235 = vsel %vm176, %v1229, 0
        %v1238 = vsel %vm176, %v1230, 0
        %1240 = vmatprep.subr.mxu0 0.0
        %1241 = vmatpush1.msra.mxu0 %v1232
        %1242 = vmatprep.subr.mxu0 0.0
        %1243 = vmatpush1.msra.mxu0 0.0
        %1244 = vmatprep.subr.mxu0 0.0
        %1245 = vmatpush1.msra.mxu0 0.0
        %1246 = vmatprep.subr.mxu0 0.0
        %1247 = vmatpush1.msra.mxu0 0.0
        %1248 = vmatprep.subr.mxu0 0.0
        %1249 = vmatpush1.msra.mxu0 0.0
        %1250 = vmatprep.subr.mxu0 0.0
        %1251 = vmatpush1.msra.mxu0 0.0
        %1252 = vmatprep.subr.mxu0 0.0
        %1253 = vmatpush1.msra.mxu0 0.0
        %1254 = vmatprep.subr.mxu0 0.0
        %1255 = vmatpush1.msra.mxu0 0.0
        %1256 = vmatprep.subr.mxu0 0.0
        %1257 = vmatpush1.msra.mxu0 0.0
        %1258 = vmatprep.subr.mxu0 0.0
        %1259 = vmatpush1.msra.mxu0 0.0
        %1260 = vmatprep.subr.mxu0 0.0
        %1261 = vmatpush1.msra.mxu0 0.0
        %1262 = vmatprep.subr.mxu0 0.0
        %1263 = vmatpush1.msra.mxu0 0.0
        %1264 = vmatprep.subr.mxu0 0.0
        %1265 = vmatpush1.msra.mxu0 0.0
        %1266 = vmatprep.subr.mxu0 0.0
        %1267 = vmatpush1.msra.mxu0 0.0
        %1268 = vmatprep.subr.mxu0 0.0
        %1269 = vmatpush1.msra.mxu0 0.0
        %1270 = vmatprep.subr.mxu0 0.0
        %1271 = vmatpush1.msra.mxu0 0.0
        %1272 = vmatprep.subr.mxu0 0.0
        %1273 = vmatpush1.msra.mxu0 0.0
        %1274 = vmatprep.subr.mxu0 0.0
        %1275 = vmatpush1.msra.mxu0 0.0
        %1276 = vmatprep.subr.mxu0 0.0
        %1277 = vmatpush1.msra.mxu0 0.0
        %1278 = vmatprep.subr.mxu0 0.0
        %1279 = vmatpush1.msra.mxu0 0.0
        %1280 = vmatprep.subr.mxu0 0.0
        %1281 = vmatpush1.msra.mxu0 0.0
        %1282 = vmatprep.subr.mxu0 0.0
        %1283 = vmatpush1.msra.mxu0 0.0
        %1284 = vmatprep.subr.mxu0 0.0
        %1285 = vmatpush1.msra.mxu0 0.0
        %1286 = vmatprep.subr.mxu0 0.0
        %1287 = vmatpush1.msra.mxu0 0.0
        %1288 = vmatprep.subr.mxu0 0.0
        %1289 = vmatpush1.msra.mxu0 0.0
        %1290 = vmatprep.subr.mxu0 0.0
        %1291 = vmatpush1.msra.mxu0 0.0
        %1292 = vmatprep.subr.mxu0 0.0
        %1293 = vmatpush1.msra.mxu0 0.0
        %1294 = vmatprep.subr.mxu0 0.0
        %1295 = vmatpush1.msra.mxu0 0.0
        %1296 = vmatprep.subr.mxu0 0.0
        %1297 = vmatpush1.msra.mxu0 0.0
        %1298 = vmatprep.subr.mxu0 0.0
        %1299 = vmatpush1.msra.mxu0 0.0
        %1300 = vmatprep.subr.mxu0 0.0
        %1301 = vmatpush1.msra.mxu0 0.0
        %1302 = vmatprep.subr.mxu0 0.0
        %1303 = vmatpush1.msra.mxu0 0.0
        %1304 = vmatprep.mubr.f32.mxu0 0.0
        %1305 = vmatmul.mubr.f32.gmra.mrb[0].mxu0 %v1235
        %v1306 = vpop.f32.mrb[0].mxu0
        %v1307 = vadd.f32 0.0, %v1306
        %v1308 = vpop.f32.mrb[0].mxu0
        %1309 = vmatprep.mubr.f32.mxu0 0.0
        %1310 = vmatmul.mubr.f32.gmra.mrb[0].mxu0 %v1238
        %v1311 = vpop.f32.mrb[0].mxu0
        %v1312 = vadd.f32 0.0, %v1311
        %v1313 = vpop.f32.mrb[0].mxu0
        %1314 = vdwg.mxu0
        %v1315 = vadd.f32 %v1226, %v1307
        %v1316 = vadd.f32 %v1227, %v1312
        %s1317 = scalar_lea.vmem %s1, 208
        %v1318 = vld [vmem:[%s1317] sm:$0xff]
        %v1319 = vld [vmem:[%s1317 + $0x8] sm:$0xff]
        %1320 = vrot.lane.b32.xlu0 %v426, 126
        %v1321 = vpop.permute.xlu0 %1320
        %v1324 = vsel %vm176, %v1318, 0
        %v1327 = vsel %vm176, %v1319, 0
        %1329 = vmatprep.subr.mxu0 0.0
        %1330 = vmatpush1.msra.mxu0 %v1321
        %1331 = vmatprep.subr.mxu0 0.0
        %1332 = vmatpush1.msra.mxu0 0.0
        %1333 = vmatprep.subr.mxu0 0.0
        %1334 = vmatpush1.msra.mxu0 0.0
        %1335 = vmatprep.subr.mxu0 0.0
        %1336 = vmatpush1.msra.mxu0 0.0
        %1337 = vmatprep.subr.mxu0 0.0
        %1338 = vmatpush1.msra.mxu0 0.0
        %1339 = vmatprep.subr.mxu0 0.0
        %1340 = vmatpush1.msra.mxu0 0.0
        %1341 = vmatprep.subr.mxu0 0.0
        %1342 = vmatpush1.msra.mxu0 0.0
        %1343 = vmatprep.subr.mxu0 0.0
        %1344 = vmatpush1.msra.mxu0 0.0
        %1345 = vmatprep.subr.mxu0 0.0
        %1346 = vmatpush1.msra.mxu0 0.0
        %1347 = vmatprep.subr.mxu0 0.0
        %1348 = vmatpush1.msra.mxu0 0.0
        %1349 = vmatprep.subr.mxu0 0.0
        %1350 = vmatpush1.msra.mxu0 0.0
        %1351 = vmatprep.subr.mxu0 0.0
        %1352 = vmatpush1.msra.mxu0 0.0
        %1353 = vmatprep.subr.mxu0 0.0
        %1354 = vmatpush1.msra.mxu0 0.0
        %1355 = vmatprep.subr.mxu0 0.0
        %1356 = vmatpush1.msra.mxu0 0.0
        %1357 = vmatprep.subr.mxu0 0.0
        %1358 = vmatpush1.msra.mxu0 0.0
        %1359 = vmatprep.subr.mxu0 0.0
        %1360 = vmatpush1.msra.mxu0 0.0
        %1361 = vmatprep.subr.mxu0 0.0
        %1362 = vmatpush1.msra.mxu0 0.0
        %1363 = vmatprep.subr.mxu0 0.0
        %1364 = vmatpush1.msra.mxu0 0.0
        %1365 = vmatprep.subr.mxu0 0.0
        %1366 = vmatpush1.msra.mxu0 0.0
        %1367 = vmatprep.subr.mxu0 0.0
        %1368 = vmatpush1.msra.mxu0 0.0
        %1369 = vmatprep.subr.mxu0 0.0
        %1370 = vmatpush1.msra.mxu0 0.0
        %1371 = vmatprep.subr.mxu0 0.0
        %1372 = vmatpush1.msra.mxu0 0.0
        %1373 = vmatprep.subr.mxu0 0.0
        %1374 = vmatpush1.msra.mxu0 0.0
        %1375 = vmatprep.subr.mxu0 0.0
        %1376 = vmatpush1.msra.mxu0 0.0
        %1377 = vmatprep.subr.mxu0 0.0
        %1378 = vmatpush1.msra.mxu0 0.0
        %1379 = vmatprep.subr.mxu0 0.0
        %1380 = vmatpush1.msra.mxu0 0.0
        %1381 = vmatprep.subr.mxu0 0.0
        %1382 = vmatpush1.msra.mxu0 0.0
        %1383 = vmatprep.subr.mxu0 0.0
        %1384 = vmatpush1.msra.mxu0 0.0
        %1385 = vmatprep.subr.mxu0 0.0
        %1386 = vmatpush1.msra.mxu0 0.0
        %1387 = vmatprep.subr.mxu0 0.0
        %1388 = vmatpush1.msra.mxu0 0.0
        %1389 = vmatprep.subr.mxu0 0.0
        %1390 = vmatpush1.msra.mxu0 0.0
        %1391 = vmatprep.subr.mxu0 0.0
        %1392 = vmatpush1.msra.mxu0 0.0
        %1393 = vmatprep.mubr.f32.mxu0 0.0
        %1394 = vmatmul.mubr.f32.gmra.mrb[0].mxu0 %v1324
        %v1395 = vpop.f32.mrb[0].mxu0
        %v1396 = vadd.f32 0.0, %v1395
        %v1397 = vpop.f32.mrb[0].mxu0
        %1398 = vmatprep.mubr.f32.mxu0 0.0
        %1399 = vmatmul.mubr.f32.gmra.mrb[0].mxu0 %v1327
        %v1400 = vpop.f32.mrb[0].mxu0
        %v1401 = vadd.f32 0.0, %v1400
        %v1402 = vpop.f32.mrb[0].mxu0
        %1403 = vdwg.mxu0
        %v1404 = vadd.f32 %v1315, %v1396
        %v1405 = vadd.f32 %v1316, %v1401
        %s1406 = scalar_lea.vmem %s1, 224
        %v1407 = vld [vmem:[%s1406] sm:$0xff]
        %v1408 = vld [vmem:[%s1406 + $0x8] sm:$0xff]
        %1409 = vrot.lane.b32.xlu0 %v513, 126
        %v1410 = vpop.permute.xlu0 %1409
        %v1413 = vsel %vm176, %v1407, 0
        %v1416 = vsel %vm176, %v1408, 0
        %1418 = vmatprep.subr.mxu0 0.0
        %1419 = vmatpush1.msra.mxu0 %v1410
        %1420 = vmatprep.subr.mxu0 0.0
        %1421 = vmatpush1.msra.mxu0 0.0
        %1422 = vmatprep.subr.mxu0 0.0
        %1423 = vmatpush1.msra.mxu0 0.0
        %1424 = vmatprep.subr.mxu0 0.0
        %1425 = vmatpush1.msra.mxu0 0.0
        %1426 = vmatprep.subr.mxu0 0.0
        %1427 = vmatpush1.msra.mxu0 0.0
        %1428 = vmatprep.subr.mxu0 0.0
        %1429 = vmatpush1.msra.mxu0 0.0
        %1430 = vmatprep.subr.mxu0 0.0
        %1431 = vmatpush1.msra.mxu0 0.0
        %1432 = vmatprep.subr.mxu0 0.0
        %1433 = vmatpush1.msra.mxu0 0.0
        %1434 = vmatprep.subr.mxu0 0.0
        %1435 = vmatpush1.msra.mxu0 0.0
        %1436 = vmatprep.subr.mxu0 0.0
        %1437 = vmatpush1.msra.mxu0 0.0
        %1438 = vmatprep.subr.mxu0 0.0
        %1439 = vmatpush1.msra.mxu0 0.0
        %1440 = vmatprep.subr.mxu0 0.0
        %1441 = vmatpush1.msra.mxu0 0.0
        %1442 = vmatprep.subr.mxu0 0.0
        %1443 = vmatpush1.msra.mxu0 0.0
        %1444 = vmatprep.subr.mxu0 0.0
        %1445 = vmatpush1.msra.mxu0 0.0
        %1446 = vmatprep.subr.mxu0 0.0
        %1447 = vmatpush1.msra.mxu0 0.0
        %1448 = vmatprep.subr.mxu0 0.0
        %1449 = vmatpush1.msra.mxu0 0.0
        %1450 = vmatprep.subr.mxu0 0.0
        %1451 = vmatpush1.msra.mxu0 0.0
        %1452 = vmatprep.subr.mxu0 0.0
        %1453 = vmatpush1.msra.mxu0 0.0
        %1454 = vmatprep.subr.mxu0 0.0
        %1455 = vmatpush1.msra.mxu0 0.0
        %1456 = vmatprep.subr.mxu0 0.0
        %1457 = vmatpush1.msra.mxu0 0.0
        %1458 = vmatprep.subr.mxu0 0.0
        %1459 = vmatpush1.msra.mxu0 0.0
        %1460 = vmatprep.subr.mxu0 0.0
        %1461 = vmatpush1.msra.mxu0 0.0
        %1462 = vmatprep.subr.mxu0 0.0
        %1463 = vmatpush1.msra.mxu0 0.0
        %1464 = vmatprep.subr.mxu0 0.0
        %1465 = vmatpush1.msra.mxu0 0.0
        %1466 = vmatprep.subr.mxu0 0.0
        %1467 = vmatpush1.msra.mxu0 0.0
        %1468 = vmatprep.subr.mxu0 0.0
        %1469 = vmatpush1.msra.mxu0 0.0
        %1470 = vmatprep.subr.mxu0 0.0
        %1471 = vmatpush1.msra.mxu0 0.0
        %1472 = vmatprep.subr.mxu0 0.0
        %1473 = vmatpush1.msra.mxu0 0.0
        %1474 = vmatprep.subr.mxu0 0.0
        %1475 = vmatpush1.msra.mxu0 0.0
        %1476 = vmatprep.subr.mxu0 0.0
        %1477 = vmatpush1.msra.mxu0 0.0
        %1478 = vmatprep.subr.mxu0 0.0
        %1479 = vmatpush1.msra.mxu0 0.0
        %1480 = vmatprep.subr.mxu0 0.0
        %1481 = vmatpush1.msra.mxu0 0.0
        %1482 = vmatprep.mubr.f32.mxu0 0.0
        %1483 = vmatmul.mubr.f32.gmra.mrb[0].mxu0 %v1413
        %v1484 = vpop.f32.mrb[0].mxu0
        %v1485 = vadd.f32 0.0, %v1484
        %v1486 = vpop.f32.mrb[0].mxu0
        %1487 = vmatprep.mubr.f32.mxu0 0.0
        %1488 = vmatmul.mubr.f32.gmra.mrb[0].mxu0 %v1416
        %v1489 = vpop.f32.mrb[0].mxu0
        %v1490 = vadd.f32 0.0, %v1489
        %v1491 = vpop.f32.mrb[0].mxu0
        %1492 = vdwg.mxu0
        %v1493 = vadd.f32 %v1404, %v1485
        %v1494 = vadd.f32 %v1405, %v1490
        %s1495 = scalar_lea.vmem %s1, 240
        %v1496 = vld [vmem:[%s1495] sm:$0xff]
        %v1497 = vld [vmem:[%s1495 + $0x8] sm:$0xff]
        %1498 = vrot.lane.b32.xlu0 %v169, 125
        %v1499 = vpop.permute.xlu0 %1498
        %v1502 = vsel %vm176, %v1496, 0
        %v1505 = vsel %vm176, %v1497, 0
        %1507 = vmatprep.subr.mxu0 0.0
        %1508 = vmatpush1.msra.mxu0 %v1499
        %1509 = vmatprep.subr.mxu0 0.0
        %1510 = vmatpush1.msra.mxu0 0.0
        %1511 = vmatprep.subr.mxu0 0.0
        %1512 = vmatpush1.msra.mxu0 0.0
        %1513 = vmatprep.subr.mxu0 0.0
        %1514 = vmatpush1.msra.mxu0 0.0
        %1515 = vmatprep.subr.mxu0 0.0
        %1516 = vmatpush1.msra.mxu0 0.0
        %1517 = vmatprep.subr.mxu0 0.0
        %1518 = vmatpush1.msra.mxu0 0.0
        %1519 = vmatprep.subr.mxu0 0.0
        %1520 = vmatpush1.msra.mxu0 0.0
        %1521 = vmatprep.subr.mxu0 0.0
        %1522 = vmatpush1.msra.mxu0 0.0
        %1523 = vmatprep.subr.mxu0 0.0
        %1524 = vmatpush1.msra.mxu0 0.0
        %1525 = vmatprep.subr.mxu0 0.0
        %1526 = vmatpush1.msra.mxu0 0.0
        %1527 = vmatprep.subr.mxu0 0.0
        %1528 = vmatpush1.msra.mxu0 0.0
        %1529 = vmatprep.subr.mxu0 0.0
        %1530 = vmatpush1.msra.mxu0 0.0
        %1531 = vmatprep.subr.mxu0 0.0
        %1532 = vmatpush1.msra.mxu0 0.0
        %1533 = vmatprep.subr.mxu0 0.0
        %1534 = vmatpush1.msra.mxu0 0.0
        %1535 = vmatprep.subr.mxu0 0.0
        %1536 = vmatpush1.msra.mxu0 0.0
        %1537 = vmatprep.subr.mxu0 0.0
        %1538 = vmatpush1.msra.mxu0 0.0
        %1539 = vmatprep.subr.mxu0 0.0
        %1540 = vmatpush1.msra.mxu0 0.0
        %1541 = vmatprep.subr.mxu0 0.0
        %1542 = vmatpush1.msra.mxu0 0.0
        %1543 = vmatprep.subr.mxu0 0.0
        %1544 = vmatpush1.msra.mxu0 0.0
        %1545 = vmatprep.subr.mxu0 0.0
        %1546 = vmatpush1.msra.mxu0 0.0
        %1547 = vmatprep.subr.mxu0 0.0
        %1548 = vmatpush1.msra.mxu0 0.0
        %1549 = vmatprep.subr.mxu0 0.0
        %1550 = vmatpush1.msra.mxu0 0.0
        %1551 = vmatprep.subr.mxu0 0.0
        %1552 = vmatpush1.msra.mxu0 0.0
        %1553 = vmatprep.subr.mxu0 0.0
        %1554 = vmatpush1.msra.mxu0 0.0
        %1555 = vmatprep.subr.mxu0 0.0
        %1556 = vmatpush1.msra.mxu0 0.0
        %1557 = vmatprep.subr.mxu0 0.0
        %1558 = vmatpush1.msra.mxu0 0.0
        %1559 = vmatprep.subr.mxu0 0.0
        %1560 = vmatpush1.msra.mxu0 0.0
        %1561 = vmatprep.subr.mxu0 0.0
        %1562 = vmatpush1.msra.mxu0 0.0
        %1563 = vmatprep.subr.mxu0 0.0
        %1564 = vmatpush1.msra.mxu0 0.0
        %1565 = vmatprep.subr.mxu0 0.0
        %1566 = vmatpush1.msra.mxu0 0.0
        %1567 = vmatprep.subr.mxu0 0.0
        %1568 = vmatpush1.msra.mxu0 0.0
        %1569 = vmatprep.subr.mxu0 0.0
        %1570 = vmatpush1.msra.mxu0 0.0
        %1571 = vmatprep.mubr.f32.mxu0 0.0
        %1572 = vmatmul.mubr.f32.gmra.mrb[0].mxu0 %v1502
        %v1573 = vpop.f32.mrb[0].mxu0
        %v1574 = vadd.f32 0.0, %v1573
        %v1575 = vpop.f32.mrb[0].mxu0
        %1576 = vmatprep.mubr.f32.mxu0 0.0
        %1577 = vmatmul.mubr.f32.gmra.mrb[0].mxu0 %v1505
        %v1578 = vpop.f32.mrb[0].mxu0
        %v1579 = vadd.f32 0.0, %v1578
        %v1580 = vpop.f32.mrb[0].mxu0
        %1581 = vdwg.mxu0
        %v1582 = vadd.f32 %v1493, %v1574
        %v1583 = vadd.f32 %v1494, %v1579
        %s1584 = scalar_lea.vmem %s1, 256
        %v1585 = vld [vmem:[%s1584] sm:$0xff]
        %v1586 = vld [vmem:[%s1584 + $0x8] sm:$0xff]
        %1587 = vrot.lane.b32.xlu0 %v172, 125
        %v1588 = vpop.permute.xlu0 %1587
        %v1591 = vsel %vm176, %v1585, 0
        %v1594 = vsel %vm176, %v1586, 0
        %1596 = vmatprep.subr.mxu0 0.0
        %1597 = vmatpush1.msra.mxu0 %v1588
        %1598 = vmatprep.subr.mxu0 0.0
        %1599 = vmatpush1.msra.mxu0 0.0
        %1600 = vmatprep.subr.mxu0 0.0
        %1601 = vmatpush1.msra.mxu0 0.0
        %1602 = vmatprep.subr.mxu0 0.0
        %1603 = vmatpush1.msra.mxu0 0.0
        %1604 = vmatprep.subr.mxu0 0.0
        %1605 = vmatpush1.msra.mxu0 0.0
        %1606 = vmatprep.subr.mxu0 0.0
        %1607 = vmatpush1.msra.mxu0 0.0
        %1608 = vmatprep.subr.mxu0 0.0
        %1609 = vmatpush1.msra.mxu0 0.0
        %1610 = vmatprep.subr.mxu0 0.0
        %1611 = vmatpush1.msra.mxu0 0.0
        %1612 = vmatprep.subr.mxu0 0.0
        %1613 = vmatpush1.msra.mxu0 0.0
        %1614 = vmatprep.subr.mxu0 0.0
        %1615 = vmatpush1.msra.mxu0 0.0
        %1616 = vmatprep.subr.mxu0 0.0
        %1617 = vmatpush1.msra.mxu0 0.0
        %1618 = vmatprep.subr.mxu0 0.0
        %1619 = vmatpush1.msra.mxu0 0.0
        %1620 = vmatprep.subr.mxu0 0.0
        %1621 = vmatpush1.msra.mxu0 0.0
        %1622 = vmatprep.subr.mxu0 0.0
        %1623 = vmatpush1.msra.mxu0 0.0
        %1624 = vmatprep.subr.mxu0 0.0
        %1625 = vmatpush1.msra.mxu0 0.0
        %1626 = vmatprep.subr.mxu0 0.0
        %1627 = vmatpush1.msra.mxu0 0.0
        %1628 = vmatprep.subr.mxu0 0.0
        %1629 = vmatpush1.msra.mxu0 0.0
        %1630 = vmatprep.subr.mxu0 0.0
        %1631 = vmatpush1.msra.mxu0 0.0
        %1632 = vmatprep.subr.mxu0 0.0
        %1633 = vmatpush1.msra.mxu0 0.0
        %1634 = vmatprep.subr.mxu0 0.0
        %1635 = vmatpush1.msra.mxu0 0.0
        %1636 = vmatprep.subr.mxu0 0.0
        %1637 = vmatpush1.msra.mxu0 0.0
        %1638 = vmatprep.subr.mxu0 0.0
        %1639 = vmatpush1.msra.mxu0 0.0
        %1640 = vmatprep.subr.mxu0 0.0
        %1641 = vmatpush1.msra.mxu0 0.0
        %1642 = vmatprep.subr.mxu0 0.0
        %1643 = vmatpush1.msra.mxu0 0.0
        %1644 = vmatprep.subr.mxu0 0.0
        %1645 = vmatpush1.msra.mxu0 0.0
        %1646 = vmatprep.subr.mxu0 0.0
        %1647 = vmatpush1.msra.mxu0 0.0
        %1648 = vmatprep.subr.mxu0 0.0
        %1649 = vmatpush1.msra.mxu0 0.0
        %1650 = vmatprep.subr.mxu0 0.0
        %1651 = vmatpush1.msra.mxu0 0.0
        %1652 = vmatprep.subr.mxu0 0.0
        %1653 = vmatpush1.msra.mxu0 0.0
        %1654 = vmatprep.subr.mxu0 0.0
        %1655 = vmatpush1.msra.mxu0 0.0
        %1656 = vmatprep.subr.mxu0 0.0
        %1657 = vmatpush1.msra.mxu0 0.0
        %1658 = vmatprep.subr.mxu0 0.0
        %1659 = vmatpush1.msra.mxu0 0.0
        %1660 = vmatprep.mubr.f32.mxu0 0.0
        %1661 = vmatmul.mubr.f32.gmra.mrb[0].mxu0 %v1591
        %v1662 = vpop.f32.mrb[0].mxu0
        %v1663 = vadd.f32 0.0, %v1662
        %v1664 = vpop.f32.mrb[0].mxu0
        %1665 = vmatprep.mubr.f32.mxu0 0.0
        %1666 = vmatmul.mubr.f32.gmra.mrb[0].mxu0 %v1594
        %v1667 = vpop.f32.mrb[0].mxu0
        %v1668 = vadd.f32 0.0, %v1667
        %v1669 = vpop.f32.mrb[0].mxu0
        %1670 = vdwg.mxu0
        %v1671 = vadd.f32 %v1582, %v1663
        %v1672 = vadd.f32 %v1583, %v1668
        %s1673 = scalar_lea.vmem %s1, 272
        %v1674 = vld [vmem:[%s1673] sm:$0xff]
        %v1675 = vld [vmem:[%s1673 + $0x8] sm:$0xff]
        %1676 = vrot.lane.b32.xlu0 %v339, 125
        %v1677 = vpop.permute.xlu0 %1676
        %v1680 = vsel %vm176, %v1674, 0
        %v1683 = vsel %vm176, %v1675, 0
        %1685 = vmatprep.subr.mxu0 0.0
        %1686 = vmatpush1.msra.mxu0 %v1677
        %1687 = vmatprep.subr.mxu0 0.0
        %1688 = vmatpush1.msra.mxu0 0.0
        %1689 = vmatprep.subr.mxu0 0.0
        %1690 = vmatpush1.msra.mxu0 0.0
        %1691 = vmatprep.subr.mxu0 0.0
        %1692 = vmatpush1.msra.mxu0 0.0
        %1693 = vmatprep.subr.mxu0 0.0
        %1694 = vmatpush1.msra.mxu0 0.0
        %1695 = vmatprep.subr.mxu0 0.0
        %1696 = vmatpush1.msra.mxu0 0.0
        %1697 = vmatprep.subr.mxu0 0.0
        %1698 = vmatpush1.msra.mxu0 0.0
        %1699 = vmatprep.subr.mxu0 0.0
        %1700 = vmatpush1.msra.mxu0 0.0
        %1701 = vmatprep.subr.mxu0 0.0
        %1702 = vmatpush1.msra.mxu0 0.0
        %1703 = vmatprep.subr.mxu0 0.0
        %1704 = vmatpush1.msra.mxu0 0.0
        %1705 = vmatprep.subr.mxu0 0.0
        %1706 = vmatpush1.msra.mxu0 0.0
        %1707 = vmatprep.subr.mxu0 0.0
        %1708 = vmatpush1.msra.mxu0 0.0
        %1709 = vmatprep.subr.mxu0 0.0
        %1710 = vmatpush1.msra.mxu0 0.0
        %1711 = vmatprep.subr.mxu0 0.0
        %1712 = vmatpush1.msra.mxu0 0.0
        %1713 = vmatprep.subr.mxu0 0.0
        %1714 = vmatpush1.msra.mxu0 0.0
        %1715 = vmatprep.subr.mxu0 0.0
        %1716 = vmatpush1.msra.mxu0 0.0
        %1717 = vmatprep.subr.mxu0 0.0
        %1718 = vmatpush1.msra.mxu0 0.0
        %1719 = vmatprep.subr.mxu0 0.0
        %1720 = vmatpush1.msra.mxu0 0.0
        %1721 = vmatprep.subr.mxu0 0.0
        %1722 = vmatpush1.msra.mxu0 0.0
        %1723 = vmatprep.subr.mxu0 0.0
        %1724 = vmatpush1.msra.mxu0 0.0
        %1725 = vmatprep.subr.mxu0 0.0
        %1726 = vmatpush1.msra.mxu0 0.0
        %1727 = vmatprep.subr.mxu0 0.0
        %1728 = vmatpush1.msra.mxu0 0.0
        %1729 = vmatprep.subr.mxu0 0.0
        %1730 = vmatpush1.msra.mxu0 0.0
        %1731 = vmatprep.subr.mxu0 0.0
        %1732 = vmatpush1.msra.mxu0 0.0
        %1733 = vmatprep.subr.mxu0 0.0
        %1734 = vmatpush1.msra.mxu0 0.0
        %1735 = vmatprep.subr.mxu0 0.0
        %1736 = vmatpush1.msra.mxu0 0.0
        %1737 = vmatprep.subr.mxu0 0.0
        %1738 = vmatpush1.msra.mxu0 0.0
        %1739 = vmatprep.subr.mxu0 0.0
        %1740 = vmatpush1.msra.mxu0 0.0
        %1741 = vmatprep.subr.mxu0 0.0
        %1742 = vmatpush1.msra.mxu0 0.0
        %1743 = vmatprep.subr.mxu0 0.0
        %1744 = vmatpush1.msra.mxu0 0.0
        %1745 = vmatprep.subr.mxu0 0.0
        %1746 = vmatpush1.msra.mxu0 0.0
        %1747 = vmatprep.subr.mxu0 0.0
        %1748 = vmatpush1.msra.mxu0 0.0
        %1749 = vmatprep.mubr.f32.mxu0 0.0
        %1750 = vmatmul.mubr.f32.gmra.mrb[0].mxu0 %v1680
        %v1751 = vpop.f32.mrb[0].mxu0
        %v1752 = vadd.f32 0.0, %v1751
        %v1753 = vpop.f32.mrb[0].mxu0
        %1754 = vmatprep.mubr.f32.mxu0 0.0
        %1755 = vmatmul.mubr.f32.gmra.mrb[0].mxu0 %v1683
        %v1756 = vpop.f32.mrb[0].mxu0
        %v1757 = vadd.f32 0.0, %v1756
        %v1758 = vpop.f32.mrb[0].mxu0
        %1759 = vdwg.mxu0
        %v1760 = vadd.f32 %v1671, %v1752
        %v1761 = vadd.f32 %v1672, %v1757
        %s1762 = scalar_lea.vmem %s1, 288
        %v1763 = vld [vmem:[%s1762] sm:$0xff]
        %v1764 = vld [vmem:[%s1762 + $0x8] sm:$0xff]
        %1765 = vrot.lane.b32.xlu0 %v426, 125
        %v1766 = vpop.permute.xlu0 %1765
        %v1769 = vsel %vm176, %v1763, 0
        %v1772 = vsel %vm176, %v1764, 0
        %1774 = vmatprep.subr.mxu0 0.0
        %1775 = vmatpush1.msra.mxu0 %v1766
        %1776 = vmatprep.subr.mxu0 0.0
        %1777 = vmatpush1.msra.mxu0 0.0
        %1778 = vmatprep.subr.mxu0 0.0
        %1779 = vmatpush1.msra.mxu0 0.0
        %1780 = vmatprep.subr.mxu0 0.0
        %1781 = vmatpush1.msra.mxu0 0.0
        %1782 = vmatprep.subr.mxu0 0.0
        %1783 = vmatpush1.msra.mxu0 0.0
        %1784 = vmatprep.subr.mxu0 0.0
        %1785 = vmatpush1.msra.mxu0 0.0
        %1786 = vmatprep.subr.mxu0 0.0
        %1787 = vmatpush1.msra.mxu0 0.0
        %1788 = vmatprep.subr.mxu0 0.0
        %1789 = vmatpush1.msra.mxu0 0.0
        %1790 = vmatprep.subr.mxu0 0.0
        %1791 = vmatpush1.msra.mxu0 0.0
        %1792 = vmatprep.subr.mxu0 0.0
        %1793 = vmatpush1.msra.mxu0 0.0
        %1794 = vmatprep.subr.mxu0 0.0
        %1795 = vmatpush1.msra.mxu0 0.0
        %1796 = vmatprep.subr.mxu0 0.0
        %1797 = vmatpush1.msra.mxu0 0.0
        %1798 = vmatprep.subr.mxu0 0.0
        %1799 = vmatpush1.msra.mxu0 0.0
        %1800 = vmatprep.subr.mxu0 0.0
        %1801 = vmatpush1.msra.mxu0 0.0
        %1802 = vmatprep.subr.mxu0 0.0
        %1803 = vmatpush1.msra.mxu0 0.0
        %1804 = vmatprep.subr.mxu0 0.0
        %1805 = vmatpush1.msra.mxu0 0.0
        %1806 = vmatprep.subr.mxu0 0.0
        %1807 = vmatpush1.msra.mxu0 0.0
        %1808 = vmatprep.subr.mxu0 0.0
        %1809 = vmatpush1.msra.mxu0 0.0
        %1810 = vmatprep.subr.mxu0 0.0
        %1811 = vmatpush1.msra.mxu0 0.0
        %1812 = vmatprep.subr.mxu0 0.0
        %1813 = vmatpush1.msra.mxu0 0.0
        %1814 = vmatprep.subr.mxu0 0.0
        %1815 = vmatpush1.msra.mxu0 0.0
        %1816 = vmatprep.subr.mxu0 0.0
        %1817 = vmatpush1.msra.mxu0 0.0
        %1818 = vmatprep.subr.mxu0 0.0
        %1819 = vmatpush1.msra.mxu0 0.0
        %1820 = vmatprep.subr.mxu0 0.0
        %1821 = vmatpush1.msra.mxu0 0.0
        %1822 = vmatprep.subr.mxu0 0.0
        %1823 = vmatpush1.msra.mxu0 0.0
        %1824 = vmatprep.subr.mxu0 0.0
        %1825 = vmatpush1.msra.mxu0 0.0
        %1826 = vmatprep.subr.mxu0 0.0
        %1827 = vmatpush1.msra.mxu0 0.0
        %1828 = vmatprep.subr.mxu0 0.0
        %1829 = vmatpush1.msra.mxu0 0.0
        %1830 = vmatprep.subr.mxu0 0.0
        %1831 = vmatpush1.msra.mxu0 0.0
        %1832 = vmatprep.subr.mxu0 0.0
        %1833 = vmatpush1.msra.mxu0 0.0
        %1834 = vmatprep.subr.mxu0 0.0
        %1835 = vmatpush1.msra.mxu0 0.0
        %1836 = vmatprep.subr.mxu0 0.0
        %1837 = vmatpush1.msra.mxu0 0.0
        %1838 = vmatprep.mubr.f32.mxu0 0.0
        %1839 = vmatmul.mubr.f32.gmra.mrb[0].mxu0 %v1769
        %v1840 = vpop.f32.mrb[0].mxu0
        %v1841 = vadd.f32 0.0, %v1840
        %v1842 = vpop.f32.mrb[0].mxu0
        %1843 = vmatprep.mubr.f32.mxu0 0.0
        %1844 = vmatmul.mubr.f32.gmra.mrb[0].mxu0 %v1772
        %v1845 = vpop.f32.mrb[0].mxu0
        %v1846 = vadd.f32 0.0, %v1845
        %v1847 = vpop.f32.mrb[0].mxu0
        %1848 = vdwg.mxu0
        %v1849 = vadd.f32 %v1760, %v1841
        %v1850 = vadd.f32 %v1761, %v1846
        %s1851 = scalar_lea.vmem %s1, 304
        %v1852 = vld [vmem:[%s1851] sm:$0xff]
        %v1853 = vld [vmem:[%s1851 + $0x8] sm:$0xff]
        %1854 = vrot.lane.b32.xlu0 %v513, 125
        %v1855 = vpop.permute.xlu0 %1854
        %v1858 = vsel %vm176, %v1852, 0
        %v1861 = vsel %vm176, %v1853, 0
        %1863 = vmatprep.subr.mxu0 0.0
        %1864 = vmatpush1.msra.mxu0 %v1855
        %1865 = vmatprep.subr.mxu0 0.0
        %1866 = vmatpush1.msra.mxu0 0.0
        %1867 = vmatprep.subr.mxu0 0.0
        %1868 = vmatpush1.msra.mxu0 0.0
        %1869 = vmatprep.subr.mxu0 0.0
        %1870 = vmatpush1.msra.mxu0 0.0
        %1871 = vmatprep.subr.mxu0 0.0
        %1872 = vmatpush1.msra.mxu0 0.0
        %1873 = vmatprep.subr.mxu0 0.0
        %1874 = vmatpush1.msra.mxu0 0.0
        %1875 = vmatprep.subr.mxu0 0.0
        %1876 = vmatpush1.msra.mxu0 0.0
        %1877 = vmatprep.subr.mxu0 0.0
        %1878 = vmatpush1.msra.mxu0 0.0
        %1879 = vmatprep.subr.mxu0 0.0
        %1880 = vmatpush1.msra.mxu0 0.0
        %1881 = vmatprep.subr.mxu0 0.0
        %1882 = vmatpush1.msra.mxu0 0.0
        %1883 = vmatprep.subr.mxu0 0.0
        %1884 = vmatpush1.msra.mxu0 0.0
        %1885 = vmatprep.subr.mxu0 0.0
        %1886 = vmatpush1.msra.mxu0 0.0
        %1887 = vmatprep.subr.mxu0 0.0
        %1888 = vmatpush1.msra.mxu0 0.0
        %1889 = vmatprep.subr.mxu0 0.0
        %1890 = vmatpush1.msra.mxu0 0.0
        %1891 = vmatprep.subr.mxu0 0.0
        %1892 = vmatpush1.msra.mxu0 0.0
        %1893 = vmatprep.subr.mxu0 0.0
        %1894 = vmatpush1.msra.mxu0 0.0
        %1895 = vmatprep.subr.mxu0 0.0
        %1896 = vmatpush1.msra.mxu0 0.0
        %1897 = vmatprep.subr.mxu0 0.0
        %1898 = vmatpush1.msra.mxu0 0.0
        %1899 = vmatprep.subr.mxu0 0.0
        %1900 = vmatpush1.msra.mxu0 0.0
        %1901 = vmatprep.subr.mxu0 0.0
        %1902 = vmatpush1.msra.mxu0 0.0
        %1903 = vmatprep.subr.mxu0 0.0
        %1904 = vmatpush1.msra.mxu0 0.0
        %1905 = vmatprep.subr.mxu0 0.0
        %1906 = vmatpush1.msra.mxu0 0.0
        %1907 = vmatprep.subr.mxu0 0.0
        %1908 = vmatpush1.msra.mxu0 0.0
        %1909 = vmatprep.subr.mxu0 0.0
        %1910 = vmatpush1.msra.mxu0 0.0
        %1911 = vmatprep.subr.mxu0 0.0
        %1912 = vmatpush1.msra.mxu0 0.0
        %1913 = vmatprep.subr.mxu0 0.0
        %1914 = vmatpush1.msra.mxu0 0.0
        %1915 = vmatprep.subr.mxu0 0.0
        %1916 = vmatpush1.msra.mxu0 0.0
        %1917 = vmatprep.subr.mxu0 0.0
        %1918 = vmatpush1.msra.mxu0 0.0
        %1919 = vmatprep.subr.mxu0 0.0
        %1920 = vmatpush1.msra.mxu0 0.0
        %1921 = vmatprep.subr.mxu0 0.0
        %1922 = vmatpush1.msra.mxu0 0.0
        %1923 = vmatprep.subr.mxu0 0.0
        %1924 = vmatpush1.msra.mxu0 0.0
        %1925 = vmatprep.subr.mxu0 0.0
        %1926 = vmatpush1.msra.mxu0 0.0
        %1927 = vmatprep.mubr.f32.mxu0 0.0
        %1928 = vmatmul.mubr.f32.gmra.mrb[0].mxu0 %v1858
        %v1929 = vpop.f32.mrb[0].mxu0
        %v1930 = vadd.f32 0.0, %v1929
        %v1931 = vpop.f32.mrb[0].mxu0
        %1932 = vmatprep.mubr.f32.mxu0 0.0
        %1933 = vmatmul.mubr.f32.gmra.mrb[0].mxu0 %v1861
        %v1934 = vpop.f32.mrb[0].mxu0
        %v1935 = vadd.f32 0.0, %v1934
        %v1936 = vpop.f32.mrb[0].mxu0
        %1937 = vdwg.mxu0
        %v1938 = vadd.f32 %v1849, %v1930
        %v1939 = vadd.f32 %v1850, %v1935
        %s1940 = scalar_lea.vmem %s1, 320
        %v1941 = vld [vmem:[%s1940] sm:$0xff]
        %v1942 = vld [vmem:[%s1940 + $0x8] sm:$0xff]
        %1943 = vrot.lane.b32.xlu0 %v169, 124
        %v1944 = vpop.permute.xlu0 %1943
        %v1947 = vsel %vm176, %v1941, 0
        %v1950 = vsel %vm176, %v1942, 0
        %1952 = vmatprep.subr.mxu0 0.0
        %1953 = vmatpush1.msra.mxu0 %v1944
        %1954 = vmatprep.subr.mxu0 0.0
        %1955 = vmatpush1.msra.mxu0 0.0
        %1956 = vmatprep.subr.mxu0 0.0
        %1957 = vmatpush1.msra.mxu0 0.0
        %1958 = vmatprep.subr.mxu0 0.0
        %1959 = vmatpush1.msra.mxu0 0.0
        %1960 = vmatprep.subr.mxu0 0.0
        %1961 = vmatpush1.msra.mxu0 0.0
        %1962 = vmatprep.subr.mxu0 0.0
        %1963 = vmatpush1.msra.mxu0 0.0
        %1964 = vmatprep.subr.mxu0 0.0
        %1965 = vmatpush1.msra.mxu0 0.0
        %1966 = vmatprep.subr.mxu0 0.0
        %1967 = vmatpush1.msra.mxu0 0.0
        %1968 = vmatprep.subr.mxu0 0.0
        %1969 = vmatpush1.msra.mxu0 0.0
        %1970 = vmatprep.subr.mxu0 0.0
        %1971 = vmatpush1.msra.mxu0 0.0
        %1972 = vmatprep.subr.mxu0 0.0
        %1973 = vmatpush1.msra.mxu0 0.0
        %1974 = vmatprep.subr.mxu0 0.0
        %1975 = vmatpush1.msra.mxu0 0.0
        %1976 = vmatprep.subr.mxu0 0.0
        %1977 = vmatpush1.msra.mxu0 0.0
        %1978 = vmatprep.subr.mxu0 0.0
        %1979 = vmatpush1.msra.mxu0 0.0
        %1980 = vmatprep.subr.mxu0 0.0
        %1981 = vmatpush1.msra.mxu0 0.0
        %1982 = vmatprep.subr.mxu0 0.0
        %1983 = vmatpush1.msra.mxu0 0.0
        %1984 = vmatprep.subr.mxu0 0.0
        %1985 = vmatpush1.msra.mxu0 0.0
        %1986 = vmatprep.subr.mxu0 0.0
        %1987 = vmatpush1.msra.mxu0 0.0
        %1988 = vmatprep.subr.mxu0 0.0
        %1989 = vmatpush1.msra.mxu0 0.0
        %1990 = vmatprep.subr.mxu0 0.0
        %1991 = vmatpush1.msra.mxu0 0.0
        %1992 = vmatprep.subr.mxu0 0.0
        %1993 = vmatpush1.msra.mxu0 0.0
        %1994 = vmatprep.subr.mxu0 0.0
        %1995 = vmatpush1.msra.mxu0 0.0
        %1996 = vmatprep.subr.mxu0 0.0
        %1997 = vmatpush1.msra.mxu0 0.0
        %1998 = vmatprep.subr.mxu0 0.0
        %1999 = vmatpush1.msra.mxu0 0.0
        %2000 = vmatprep.subr.mxu0 0.0
        %2001 = vmatpush1.msra.mxu0 0.0
        %2002 = vmatprep.subr.mxu0 0.0
        %2003 = vmatpush1.msra.mxu0 0.0
        %2004 = vmatprep.subr.mxu0 0.0
        %2005 = vmatpush1.msra.mxu0 0.0
        %2006 = vmatprep.subr.mxu0 0.0
        %2007 = vmatpush1.msra.mxu0 0.0
        %2008 = vmatprep.subr.mxu0 0.0
        %2009 = vmatpush1.msra.mxu0 0.0
        %2010 = vmatprep.subr.mxu0 0.0
        %2011 = vmatpush1.msra.mxu0 0.0
        %2012 = vmatprep.subr.mxu0 0.0
        %2013 = vmatpush1.msra.mxu0 0.0
        %2014 = vmatprep.subr.mxu0 0.0
        %2015 = vmatpush1.msra.mxu0 0.0
        %2016 = vmatprep.mubr.f32.mxu0 0.0
        %2017 = vmatmul.mubr.f32.gmra.mrb[0].mxu0 %v1947
        %v2018 = vpop.f32.mrb[0].mxu0
        %v2019 = vadd.f32 0.0, %v2018
        %v2020 = vpop.f32.mrb[0].mxu0
        %2021 = vmatprep.mubr.f32.mxu0 0.0
        %2022 = vmatmul.mubr.f32.gmra.mrb[0].mxu0 %v1950
        %v2023 = vpop.f32.mrb[0].mxu0
        %v2024 = vadd.f32 0.0, %v2023
        %v2025 = vpop.f32.mrb[0].mxu0
        %2026 = vdwg.mxu0
        %v2027 = vadd.f32 %v1938, %v2019
        %v2028 = vadd.f32 %v1939, %v2024
        %s2029 = scalar_lea.vmem %s1, 336
        %v2030 = vld [vmem:[%s2029] sm:$0xff]
        %v2031 = vld [vmem:[%s2029 + $0x8] sm:$0xff]
        %2032 = vrot.lane.b32.xlu0 %v172, 124
        %v2033 = vpop.permute.xlu0 %2032
        %v2036 = vsel %vm176, %v2030, 0
        %v2039 = vsel %vm176, %v2031, 0
        %2041 = vmatprep.subr.mxu0 0.0
        %2042 = vmatpush1.msra.mxu0 %v2033
        %2043 = vmatprep.subr.mxu0 0.0
        %2044 = vmatpush1.msra.mxu0 0.0
        %2045 = vmatprep.subr.mxu0 0.0
        %2046 = vmatpush1.msra.mxu0 0.0
        %2047 = vmatprep.subr.mxu0 0.0
        %2048 = vmatpush1.msra.mxu0 0.0
        %2049 = vmatprep.subr.mxu0 0.0
        %2050 = vmatpush1.msra.mxu0 0.0
        %2051 = vmatprep.subr.mxu0 0.0
        %2052 = vmatpush1.msra.mxu0 0.0
        %2053 = vmatprep.subr.mxu0 0.0
        %2054 = vmatpush1.msra.mxu0 0.0
        %2055 = vmatprep.subr.mxu0 0.0
        %2056 = vmatpush1.msra.mxu0 0.0
        %2057 = vmatprep.subr.mxu0 0.0
        %2058 = vmatpush1.msra.mxu0 0.0
        %2059 = vmatprep.subr.mxu0 0.0
        %2060 = vmatpush1.msra.mxu0 0.0
        %2061 = vmatprep.subr.mxu0 0.0
        %2062 = vmatpush1.msra.mxu0 0.0
        %2063 = vmatprep.subr.mxu0 0.0
        %2064 = vmatpush1.msra.mxu0 0.0
        %2065 = vmatprep.subr.mxu0 0.0
        %2066 = vmatpush1.msra.mxu0 0.0
        %2067 = vmatprep.subr.mxu0 0.0
        %2068 = vmatpush1.msra.mxu0 0.0
        %2069 = vmatprep.subr.mxu0 0.0
        %2070 = vmatpush1.msra.mxu0 0.0
        %2071 = vmatprep.subr.mxu0 0.0
        %2072 = vmatpush1.msra.mxu0 0.0
        %2073 = vmatprep.subr.mxu0 0.0
        %2074 = vmatpush1.msra.mxu0 0.0
        %2075 = vmatprep.subr.mxu0 0.0
        %2076 = vmatpush1.msra.mxu0 0.0
        %2077 = vmatprep.subr.mxu0 0.0
        %2078 = vmatpush1.msra.mxu0 0.0
        %2079 = vmatprep.subr.mxu0 0.0
        %2080 = vmatpush1.msra.mxu0 0.0
        %2081 = vmatprep.subr.mxu0 0.0
        %2082 = vmatpush1.msra.mxu0 0.0
        %2083 = vmatprep.subr.mxu0 0.0
        %2084 = vmatpush1.msra.mxu0 0.0
        %2085 = vmatprep.subr.mxu0 0.0
        %2086 = vmatpush1.msra.mxu0 0.0
        %2087 = vmatprep.subr.mxu0 0.0
        %2088 = vmatpush1.msra.mxu0 0.0
        %2089 = vmatprep.subr.mxu0 0.0
        %2090 = vmatpush1.msra.mxu0 0.0
        %2091 = vmatprep.subr.mxu0 0.0
        %2092 = vmatpush1.msra.mxu0 0.0
        %2093 = vmatprep.subr.mxu0 0.0
        %2094 = vmatpush1.msra.mxu0 0.0
        %2095 = vmatprep.subr.mxu0 0.0
        %2096 = vmatpush1.msra.mxu0 0.0
        %2097 = vmatprep.subr.mxu0 0.0
        %2098 = vmatpush1.msra.mxu0 0.0
        %2099 = vmatprep.subr.mxu0 0.0
        %2100 = vmatpush1.msra.mxu0 0.0
        %2101 = vmatprep.subr.mxu0 0.0
        %2102 = vmatpush1.msra.mxu0 0.0
        %2103 = vmatprep.subr.mxu0 0.0
        %2104 = vmatpush1.msra.mxu0 0.0
        %2105 = vmatprep.mubr.f32.mxu0 0.0
        %2106 = vmatmul.mubr.f32.gmra.mrb[0].mxu0 %v2036
        %v2107 = vpop.f32.mrb[0].mxu0
        %v2108 = vadd.f32 0.0, %v2107
        %v2109 = vpop.f32.mrb[0].mxu0
        %2110 = vmatprep.mubr.f32.mxu0 0.0
        %2111 = vmatmul.mubr.f32.gmra.mrb[0].mxu0 %v2039
        %v2112 = vpop.f32.mrb[0].mxu0
        %v2113 = vadd.f32 0.0, %v2112
        %v2114 = vpop.f32.mrb[0].mxu0
        %2115 = vdwg.mxu0
        %v2116 = vadd.f32 %v2027, %v2108
        %v2117 = vadd.f32 %v2028, %v2113
        %s2118 = scalar_lea.vmem %s1, 352
        %v2119 = vld [vmem:[%s2118] sm:$0xff]
        %v2120 = vld [vmem:[%s2118 + $0x8] sm:$0xff]
        %2121 = vrot.lane.b32.xlu0 %v339, 124
        %v2122 = vpop.permute.xlu0 %2121
        %v2125 = vsel %vm176, %v2119, 0
        %v2128 = vsel %vm176, %v2120, 0
        %2130 = vmatprep.subr.mxu0 0.0
        %2131 = vmatpush1.msra.mxu0 %v2122
        %2132 = vmatprep.subr.mxu0 0.0
        %2133 = vmatpush1.msra.mxu0 0.0
        %2134 = vmatprep.subr.mxu0 0.0
        %2135 = vmatpush1.msra.mxu0 0.0
        %2136 = vmatprep.subr.mxu0 0.0
        %2137 = vmatpush1.msra.mxu0 0.0
        %2138 = vmatprep.subr.mxu0 0.0
        %2139 = vmatpush1.msra.mxu0 0.0
        %2140 = vmatprep.subr.mxu0 0.0
        %2141 = vmatpush1.msra.mxu0 0.0
        %2142 = vmatprep.subr.mxu0 0.0
        %2143 = vmatpush1.msra.mxu0 0.0
        %2144 = vmatprep.subr.mxu0 0.0
        %2145 = vmatpush1.msra.mxu0 0.0
        %2146 = vmatprep.subr.mxu0 0.0
        %2147 = vmatpush1.msra.mxu0 0.0
        %2148 = vmatprep.subr.mxu0 0.0
        %2149 = vmatpush1.msra.mxu0 0.0
        %2150 = vmatprep.subr.mxu0 0.0
        %2151 = vmatpush1.msra.mxu0 0.0
        %2152 = vmatprep.subr.mxu0 0.0
        %2153 = vmatpush1.msra.mxu0 0.0
        %2154 = vmatprep.subr.mxu0 0.0
        %2155 = vmatpush1.msra.mxu0 0.0
        %2156 = vmatprep.subr.mxu0 0.0
        %2157 = vmatpush1.msra.mxu0 0.0
        %2158 = vmatprep.subr.mxu0 0.0
        %2159 = vmatpush1.msra.mxu0 0.0
        %2160 = vmatprep.subr.mxu0 0.0
        %2161 = vmatpush1.msra.mxu0 0.0
        %2162 = vmatprep.subr.mxu0 0.0
        %2163 = vmatpush1.msra.mxu0 0.0
        %2164 = vmatprep.subr.mxu0 0.0
        %2165 = vmatpush1.msra.mxu0 0.0
        %2166 = vmatprep.subr.mxu0 0.0
        %2167 = vmatpush1.msra.mxu0 0.0
        %2168 = vmatprep.subr.mxu0 0.0
        %2169 = vmatpush1.msra.mxu0 0.0
        %2170 = vmatprep.subr.mxu0 0.0
        %2171 = vmatpush1.msra.mxu0 0.0
        %2172 = vmatprep.subr.mxu0 0.0
        %2173 = vmatpush1.msra.mxu0 0.0
        %2174 = vmatprep.subr.mxu0 0.0
        %2175 = vmatpush1.msra.mxu0 0.0
        %2176 = vmatprep.subr.mxu0 0.0
        %2177 = vmatpush1.msra.mxu0 0.0
        %2178 = vmatprep.subr.mxu0 0.0
        %2179 = vmatpush1.msra.mxu0 0.0
        %2180 = vmatprep.subr.mxu0 0.0
        %2181 = vmatpush1.msra.mxu0 0.0
        %2182 = vmatprep.subr.mxu0 0.0
        %2183 = vmatpush1.msra.mxu0 0.0
        %2184 = vmatprep.subr.mxu0 0.0
        %2185 = vmatpush1.msra.mxu0 0.0
        %2186 = vmatprep.subr.mxu0 0.0
        %2187 = vmatpush1.msra.mxu0 0.0
        %2188 = vmatprep.subr.mxu0 0.0
        %2189 = vmatpush1.msra.mxu0 0.0
        %2190 = vmatprep.subr.mxu0 0.0
        %2191 = vmatpush1.msra.mxu0 0.0
        %2192 = vmatprep.subr.mxu0 0.0
        %2193 = vmatpush1.msra.mxu0 0.0
        %2194 = vmatprep.mubr.f32.mxu0 0.0
        %2195 = vmatmul.mubr.f32.gmra.mrb[0].mxu0 %v2125
        %v2196 = vpop.f32.mrb[0].mxu0
        %v2197 = vadd.f32 0.0, %v2196
        %v2198 = vpop.f32.mrb[0].mxu0
        %2199 = vmatprep.mubr.f32.mxu0 0.0
        %2200 = vmatmul.mubr.f32.gmra.mrb[0].mxu0 %v2128
        %v2201 = vpop.f32.mrb[0].mxu0
        %v2202 = vadd.f32 0.0, %v2201
        %v2203 = vpop.f32.mrb[0].mxu0
        %2204 = vdwg.mxu0
        %v2205 = vadd.f32 %v2116, %v2197
        %v2206 = vadd.f32 %v2117, %v2202
        %s2207 = scalar_lea.vmem %s1, 368
        %v2208 = vld [vmem:[%s2207] sm:$0xff]
        %v2209 = vld [vmem:[%s2207 + $0x8] sm:$0xff]
        %2210 = vrot.lane.b32.xlu0 %v426, 124
        %v2211 = vpop.permute.xlu0 %2210
        %v2214 = vsel %vm176, %v2208, 0
        %v2217 = vsel %vm176, %v2209, 0
        %2219 = vmatprep.subr.mxu0 0.0
        %2220 = vmatpush1.msra.mxu0 %v2211
        %2221 = vmatprep.subr.mxu0 0.0
        %2222 = vmatpush1.msra.mxu0 0.0
        %2223 = vmatprep.subr.mxu0 0.0
        %2224 = vmatpush1.msra.mxu0 0.0
        %2225 = vmatprep.subr.mxu0 0.0
        %2226 = vmatpush1.msra.mxu0 0.0
        %2227 = vmatprep.subr.mxu0 0.0
        %2228 = vmatpush1.msra.mxu0 0.0
        %2229 = vmatprep.subr.mxu0 0.0
        %2230 = vmatpush1.msra.mxu0 0.0
        %2231 = vmatprep.subr.mxu0 0.0
        %2232 = vmatpush1.msra.mxu0 0.0
        %2233 = vmatprep.subr.mxu0 0.0
        %2234 = vmatpush1.msra.mxu0 0.0
        %2235 = vmatprep.subr.mxu0 0.0
        %2236 = vmatpush1.msra.mxu0 0.0
        %2237 = vmatprep.subr.mxu0 0.0
        %2238 = vmatpush1.msra.mxu0 0.0
        %2239 = vmatprep.subr.mxu0 0.0
        %2240 = vmatpush1.msra.mxu0 0.0
        %2241 = vmatprep.subr.mxu0 0.0
        %2242 = vmatpush1.msra.mxu0 0.0
        %2243 = vmatprep.subr.mxu0 0.0
        %2244 = vmatpush1.msra.mxu0 0.0
        %2245 = vmatprep.subr.mxu0 0.0
        %2246 = vmatpush1.msra.mxu0 0.0
        %2247 = vmatprep.subr.mxu0 0.0
        %2248 = vmatpush1.msra.mxu0 0.0
        %2249 = vmatprep.subr.mxu0 0.0
        %2250 = vmatpush1.msra.mxu0 0.0
        %2251 = vmatprep.subr.mxu0 0.0
        %2252 = vmatpush1.msra.mxu0 0.0
        %2253 = vmatprep.subr.mxu0 0.0
        %2254 = vmatpush1.msra.mxu0 0.0
        %2255 = vmatprep.subr.mxu0 0.0
        %2256 = vmatpush1.msra.mxu0 0.0
        %2257 = vmatprep.subr.mxu0 0.0
        %2258 = vmatpush1.msra.mxu0 0.0
        %2259 = vmatprep.subr.mxu0 0.0
        %2260 = vmatpush1.msra.mxu0 0.0
        %2261 = vmatprep.subr.mxu0 0.0
        %2262 = vmatpush1.msra.mxu0 0.0
        %2263 = vmatprep.subr.mxu0 0.0
        %2264 = vmatpush1.msra.mxu0 0.0
        %2265 = vmatprep.subr.mxu0 0.0
        %2266 = vmatpush1.msra.mxu0 0.0
        %2267 = vmatprep.subr.mxu0 0.0
        %2268 = vmatpush1.msra.mxu0 0.0
        %2269 = vmatprep.subr.mxu0 0.0
        %2270 = vmatpush1.msra.mxu0 0.0
        %2271 = vmatprep.subr.mxu0 0.0
        %2272 = vmatpush1.msra.mxu0 0.0
        %2273 = vmatprep.subr.mxu0 0.0
        %2274 = vmatpush1.msra.mxu0 0.0
        %2275 = vmatprep.subr.mxu0 0.0
        %2276 = vmatpush1.msra.mxu0 0.0
        %2277 = vmatprep.subr.mxu0 0.0
        %2278 = vmatpush1.msra.mxu0 0.0
        %2279 = vmatprep.subr.mxu0 0.0
        %2280 = vmatpush1.msra.mxu0 0.0
        %2281 = vmatprep.subr.mxu0 0.0
        %2282 = vmatpush1.msra.mxu0 0.0
        %2283 = vmatprep.mubr.f32.mxu0 0.0
        %2284 = vmatmul.mubr.f32.gmra.mrb[0].mxu0 %v2214
        %v2285 = vpop.f32.mrb[0].mxu0
        %v2286 = vadd.f32 0.0, %v2285
        %v2287 = vpop.f32.mrb[0].mxu0
        %2288 = vmatprep.mubr.f32.mxu0 0.0
        %2289 = vmatmul.mubr.f32.gmra.mrb[0].mxu0 %v2217
        %v2290 = vpop.f32.mrb[0].mxu0
        %v2291 = vadd.f32 0.0, %v2290
        %v2292 = vpop.f32.mrb[0].mxu0
        %2293 = vdwg.mxu0
        %v2294 = vadd.f32 %v2205, %v2286
        %v2295 = vadd.f32 %v2206, %v2291
        %s2296 = scalar_lea.vmem %s1, 384
        %v2297 = vld [vmem:[%s2296] sm:$0xff]
        %v2298 = vld [vmem:[%s2296 + $0x8] sm:$0xff]
        %2299 = vrot.lane.b32.xlu0 %v513, 124
        %v2300 = vpop.permute.xlu0 %2299
        %v2303 = vsel %vm176, %v2297, 0
        %v2306 = vsel %vm176, %v2298, 0
        %2308 = vmatprep.subr.mxu0 0.0
        %2309 = vmatpush1.msra.mxu0 %v2300
        %2310 = vmatprep.subr.mxu0 0.0
        %2311 = vmatpush1.msra.mxu0 0.0
        %2312 = vmatprep.subr.mxu0 0.0
        %2313 = vmatpush1.msra.mxu0 0.0
        %2314 = vmatprep.subr.mxu0 0.0
        %2315 = vmatpush1.msra.mxu0 0.0
        %2316 = vmatprep.subr.mxu0 0.0
        %2317 = vmatpush1.msra.mxu0 0.0
        %2318 = vmatprep.subr.mxu0 0.0
        %2319 = vmatpush1.msra.mxu0 0.0
        %2320 = vmatprep.subr.mxu0 0.0
        %2321 = vmatpush1.msra.mxu0 0.0
        %2322 = vmatprep.subr.mxu0 0.0
        %2323 = vmatpush1.msra.mxu0 0.0
        %2324 = vmatprep.subr.mxu0 0.0
        %2325 = vmatpush1.msra.mxu0 0.0
        %2326 = vmatprep.subr.mxu0 0.0
        %2327 = vmatpush1.msra.mxu0 0.0
        %2328 = vmatprep.subr.mxu0 0.0
        %2329 = vmatpush1.msra.mxu0 0.0
        %2330 = vmatprep.subr.mxu0 0.0
        %2331 = vmatpush1.msra.mxu0 0.0
        %2332 = vmatprep.subr.mxu0 0.0
        %2333 = vmatpush1.msra.mxu0 0.0
        %2334 = vmatprep.subr.mxu0 0.0
        %2335 = vmatpush1.msra.mxu0 0.0
        %2336 = vmatprep.subr.mxu0 0.0
        %2337 = vmatpush1.msra.mxu0 0.0
        %2338 = vmatprep.subr.mxu0 0.0
        %2339 = vmatpush1.msra.mxu0 0.0
        %2340 = vmatprep.subr.mxu0 0.0
        %2341 = vmatpush1.msra.mxu0 0.0
        %2342 = vmatprep.subr.mxu0 0.0
        %2343 = vmatpush1.msra.mxu0 0.0
        %2344 = vmatprep.subr.mxu0 0.0
        %2345 = vmatpush1.msra.mxu0 0.0
        %2346 = vmatprep.subr.mxu0 0.0
        %2347 = vmatpush1.msra.mxu0 0.0
        %2348 = vmatprep.subr.mxu0 0.0
        %2349 = vmatpush1.msra.mxu0 0.0
        %2350 = vmatprep.subr.mxu0 0.0
        %2351 = vmatpush1.msra.mxu0 0.0
        %2352 = vmatprep.subr.mxu0 0.0
        %2353 = vmatpush1.msra.mxu0 0.0
        %2354 = vmatprep.subr.mxu0 0.0
        %2355 = vmatpush1.msra.mxu0 0.0
        %2356 = vmatprep.subr.mxu0 0.0
        %2357 = vmatpush1.msra.mxu0 0.0
        %2358 = vmatprep.subr.mxu0 0.0
        %2359 = vmatpush1.msra.mxu0 0.0
        %2360 = vmatprep.subr.mxu0 0.0
        %2361 = vmatpush1.msra.mxu0 0.0
        %2362 = vmatprep.subr.mxu0 0.0
        %2363 = vmatpush1.msra.mxu0 0.0
        %2364 = vmatprep.subr.mxu0 0.0
        %2365 = vmatpush1.msra.mxu0 0.0
        %2366 = vmatprep.subr.mxu0 0.0
        %2367 = vmatpush1.msra.mxu0 0.0
        %2368 = vmatprep.subr.mxu0 0.0
        %2369 = vmatpush1.msra.mxu0 0.0
        %2370 = vmatprep.subr.mxu0 0.0
        %2371 = vmatpush1.msra.mxu0 0.0
        %2372 = vmatprep.mubr.f32.mxu0 0.0
        %2373 = vmatmul.mubr.f32.gmra.mrb[0].mxu0 %v2303
        %v2374 = vpop.f32.mrb[0].mxu0
        %v2375 = vadd.f32 0.0, %v2374
        %v2376 = vpop.f32.mrb[0].mxu0
        %2377 = vmatprep.mubr.f32.mxu0 0.0
        %2378 = vmatmul.mubr.f32.gmra.mrb[0].mxu0 %v2306
        %v2379 = vpop.f32.mrb[0].mxu0
        %v2380 = vadd.f32 0.0, %v2379
        %v2381 = vpop.f32.mrb[0].mxu0
        %2382 = vdwg.mxu0
        %v2383 = vadd.f32 %v2294, %v2375
        %v2384 = vadd.f32 %v2295, %v2380
        %v2385 = vld [vmem:[%s2] sm:$0xff]
        %v2386 = vld [vmem:[%s2 + $0x8] sm:$0xff]
        %2388 = vset.pattern.permute.xlu0 0
        %2389 = vperm.xlu0 %2388, %v2385
        %v2390 = vpop.permute.xlu0 %2389
        %2393 = vset.pattern.permute.xlu0 0
        %2394 = vperm.xlu0 %2393, %v2386
        %v2395 = vpop.permute.xlu0 %2394
        %v2397 = vadd.f32 %v2383, %v2390
        %v2398 = vadd.f32 %v2384, %v2395
        %vm2399 = vcmask 408576
        %2400 = vst.msk [vmem:[%s163] sm:$0xff] %vm2399, %v2397
        %2401 = vst.msk [vmem:[%s163 + $0x8] sm:$0xff] %vm2399, %v2398
        %s2402 = sand.u32 %s93, 1
        %s2403 = scalar_lea.sflag [#allocation3], %s2402
        %s2404 = sand.u32 %s93, 1
        %s2405 = smul.addr %s2404, 16
        %s2406 = scalar_lea.vmem [#allocation2], %s2405
        // Predicated region
        $region33: #{tpu_custom_call.1} parent=31 // pred_check
          %p2407 = pneg %p103
        $region34: #{tpu_custom_call.1} parent=31 // pred_check_branch
          %2409 = sbr.rel (%p2407) target = $region36
        $region35: #{tpu_custom_call.1} parent=31 // pred_region
          %s2411 = ssub.s32 256, 256
          %2412 = vsyncadd %s2403, %s2411
          %s2413 = smul.addr %s17, 2
          %s2414 = smul.addr %s2413, 128
          %s2415 = scalar_lea.hbm %s3, %s2414
          %s2416 = sshll.u32 %s2406, 4
          %s2417 = int_to_ptr.vmem [resolvable:$true] %s2416
          %2422 = dma.vmem_to_hbm [thread:$0]  %s2417, 256, %s2415, %s2403, 128, 128, 8
        $region36: #{tpu_custom_call.1} parent=31 // pred_fallthru
          _
      $region32: #{tpu_custom_call.1} parent=5 // pred_fallthru
        _
      %p2423 = scmp.le.s32.totalorder 2, %s12
      // Predicated region
      $region37: #{tpu_custom_call.1} parent=5 // pred_check
        %p2424 = pneg %p2423
      $region38: #{tpu_custom_call.1} parent=5 // pred_check_branch
        %2426 = sbr.rel (%p2424) target = $region40
      $region39: #{tpu_custom_call.1} parent=5 // pred_region
        %s2427 = ssub.s32 %s12, 2
        // Predicated region
        $region41: #{tpu_custom_call.1} parent=39 // pred_check
          %p2428 = pneg %p109
        $region42: #{tpu_custom_call.1} parent=39 // pred_check_branch
          %2430 = sbr.rel (%p2428) target = $region44
        $region43: #{tpu_custom_call.1} parent=39 // pred_region
          %s2431 = sand.u32 %s94, 1
          %s2432 = scalar_lea.sflag [#allocation3], %s2431
          %s2433 = sand.u32 %s94, 1
          %s2434 = smul.addr %s2433, 16
          %s2435 = scalar_lea.vmem [#allocation2], %s2434
          %2436 = dma.done %s2432, 256
        $region44: #{tpu_custom_call.1} parent=39 // pred_fallthru
          _
      $region40: #{tpu_custom_call.1} parent=5 // pred_fallthru
        _
    $region6: #{tpu_custom_call.1} parent=1 // loop_footer
      %s16 = sadd.s32 1, %s12
    $region7: #{tpu_custom_call.1} parent=1 // loop_footer_branch
      %11 = sbr.rel target = $region3
    $region8: #{tpu_custom_call.1} parent=1 // loop_exit
      _
    %2437 = vsyncpa [#allocation3], 1
    %s2438 = scalar_lea.sflag [#allocation3], 1
    %2439 = vsyncpa %s2438, 1

</llo_original>
